<compile_context>
chip_gen: v7x
topology: tpu7x:2x2x1
jax: 0.10.0
libtpu: 0.0.40
codegen_flags: <defaults>
</compile_context>

<pallas_src>
import functools

import jax
import jax.numpy as jnp
from jax import lax
from jax.experimental import pallas as pl
from jax.experimental.pallas import tpu as pltpu


def _make_kernel(B_BLK, L_CHUNK, S):
    def kernel(tok_ref, fsa_ref, out_ref, hid_ref):
        """One grid step == one (batch block, L chunk).

        tok_ref : SMEM (B, L) int32     -- scalar-prefetched token ids
        fsa_ref : VMEM (V, S, S) f32    -- full transition tensor, resident
        out_ref : VMEM (B_BLK, L_CHUNK*S) f32 -- lane-dense output tile
        hid_ref : VMEM (B_BLK, S) f32   -- hidden state carried across L chunks
        """
        bb = pl.program_id(0)
        lc = pl.program_id(1)
        b0 = bb * B_BLK
        l0 = lc * L_CHUNK

        # h0 = onehot(0) for every row of the block (constants hoisted out of the when).
        col = lax.broadcasted_iota(jnp.int32, (B_BLK, S), dimension=1)
        h_init = jnp.where(col == 0, 1.0, 0.0).astype(jnp.float32)

        @pl.when(lc == 0)
        def _():
            hid_ref[...] = h_init

        # Carry the per-row hidden state in registers across the unrolled chunk loop.
        rows = [hid_ref[b:b + 1, :] for b in range(B_BLK)]

        for l in range(L_CHUNK):          # static unroll: every offset is a constant
            for b in range(B_BLK):        # B is tiny; unrolled at trace time
                tok = tok_ref[b0 + b, l0 + l]      # SMEM scalar token id
                tr = fsa_ref[tok]                  # (S, S) dynamic gather on vocab axis
                # (1,S) x (S,S) on the MXU: contracts the lane axis of the hidden row
                # with the sublane axis of Tr -> no transpose / relayout per step.
                hb = jnp.dot(rows[b], tr, preferred_element_type=jnp.float32)
                hb = jnp.clip(hb, -10.0, 10.0)
                rows[b] = hb
                out_ref[b:b + 1, l * S:(l + 1) * S] = hb   # static sub-store into tile

        # Persist hidden state for the next L chunk of this batch block.
        for b in range(B_BLK):
            hid_ref[b:b + 1, :] = rows[b]

    return kernel


def brnn_integrate_onehot_forward(tokens, fsa_tensor):
    """tokens: (B, L) int32, fsa_tensor: (V, S, S) f32 -> (B, L, S) f32."""
    B, L = tokens.shape
    V, S, S2 = fsa_tensor.shape
    assert S == S2

    # No runtime bounds check on VMEM gathers: clamp token ids defensively.
    tokens = jnp.clip(tokens.astype(jnp.int32), 0, V - 1)
    fsa_tensor = fsa_tensor.astype(jnp.float32)

    # Batch block: sublane-aligned (8) when it divides B, else the whole batch
    # (block dims must be divisible by 8 or equal the full dim).
    B_BLK = 8 if (B % 8 == 0) else B
    n_b_blocks = B // B_BLK

    # L chunk: the whole sequence while the output tile stays small; otherwise the
    # largest divisor of L whose lane width stays 128-aligned.
    L_CHUNK = L
    if B_BLK * L * S * 4 > (1 << 20):
        for c in range(L - 1, 0, -1):
            if L % c == 0 and (c * S) % 128 == 0 and B_BLK * c * S * 4 <= (1 << 20):
                L_CHUNK = c
                break
    n_l_chunks = L // L_CHUNK

    # VMEM budget check: the transition tensor is kept fully resident (the pipeline
    # allocates 2x the block).  Keep well under the v7x scoped budget (64 MiB physical).
    fsa_bytes = V * S * S * 4
    if 2 * fsa_bytes > 24 * 1024 * 1024:
        # TODO(synk): for large FSAs switch to a per-timestep DMA gather of only the
        # B needed (S, S) slabs (scalar-prefetch-driven index_map, pl.Buffered(2)).
        raise ValueError("fsa_tensor too large to keep resident in VMEM")

    kernel = _make_kernel(B_BLK, L_CHUNK, S)

    out_flat = pl.pallas_call(
        kernel,
        out_shape=jax.ShapeDtypeStruct((B, L * S), jnp.float32),
        grid_spec=pltpu.PrefetchScalarGridSpec(
            num_scalar_prefetch=1,                     # tokens -> SMEM
            grid=(n_b_blocks, n_l_chunks),
            in_specs=[
                # Full transition tensor resident in VMEM; constant block index, so it
                # is DMA'd once and re-used by every grid step.
                pl.BlockSpec((V, S, S), lambda bb, lc, tok: (0, 0, 0)),
            ],
            out_specs=pl.BlockSpec((B_BLK, L_CHUNK * S),
                                   lambda bb, lc, tok: (bb, lc)),
            scratch_shapes=[pltpu.VMEM((B_BLK, S), jnp.float32)],
        ),
        compiler_params=pltpu.CompilerParams(
            # Batch blocks are independent (v7x megacore split); the chunk axis carries
            # the hidden state and must stay sequential.
            dimension_semantics=("parallel", "arbitrary"),
            vmem_limit_bytes=32 * 1024 * 1024,
        ),
    )(tokens, fsa_tensor)

    # Contiguous reshape (no data movement) back to the PyTorch (B, L, S) layout.
    return out_flat.reshape(B, L, S)


def _reference_forward(tokens, fsa_tensor):
    """Plain-JAX re-implementation of the PyTorch forward for verification."""
    B, L = tokens.shape
    S = fsa_tensor.shape[1]
    h = jnp.zeros((B, S), jnp.float32).at[:, 0].set(1.0)
    outs = []
    for i in range(L):
        tr = fsa_tensor[tokens[:, i]]                        # (B, S, S)
        h = jnp.einsum("bs,bsj->bj", h, tr)
        h = jnp.clip(h, -10.0, 10.0)
        outs.append(h)
    return jnp.stack(outs, axis=1)                           # (B, L, S)


if __name__ == "__main__":
    # Small deterministic setup consistent with the module:
    # vocab V=16, states S=32, batch B=2, sequence length L=8.
    V, S, B, L = 16, 32, 2, 8
    key = jax.random.PRNGKey(0)
    k_fsa, k_tok = jax.random.split(key)

    # Mirror the `randInitial` path: normal(mean=0.5, std=1.0) clamped to [0, 1].
    fsa_tensor = jnp.clip(
        0.5 + jax.random.normal(k_fsa, (V, S, S), jnp.float32), 0.0, 1.0
    )
    tokens = jax.random.randint(k_tok, (B, L), 0, V, jnp.int32)

    out = brnn_integrate_onehot_forward(tokens, fsa_tensor)
    out = jax.block_until_ready(out)

    ref = _reference_forward(tokens, fsa_tensor)
    assert out.shape == (B, L, S)
    assert jnp.allclose(out, ref, rtol=1e-5, atol=1e-5), "mismatch vs reference"

    print("KERNEL_OK")
</pallas_src>

<mosaic_0001>
module attributes {stable_mosaic.version = 11 : i64} {
  func.func @kernel(%arg0: i32, %arg1: i32, %arg2: memref<2x8xi32, #tpu.memory_space<smem>>, %arg3: memref<16x32x32xf32, #tpu.memory_space<vmem>>, %arg4: memref<2x256xf32, #tpu.memory_space<vmem>>, %arg5: memref<2x32xf32, #tpu.memory_space<vmem>>) attributes {dimension_semantics = [#tpu.dimension_semantics<parallel>, #tpu.dimension_semantics<arbitrary>], iteration_bounds = array<i64: 1, 1>, scalar_prefetch = 1 : i64, scratch_operands = 1 : i64, tpu.core_type = #tpu.core_type<tc>, window_params = [{pipeline_mode = #tpu.pipeline_mode<synchronous>, transform_indices = @transform_0, window_bounds = array<i64: 16, 32, 32>}, {transform_indices = @transform_1, window_bounds = array<i64: 2, 256>}]} {
    %c2_i32 = arith.constant 2 : i32
    %0 = arith.muli %arg0, %c2_i32 : i32
    %c8_i32 = arith.constant 8 : i32
    %1 = arith.muli %arg1, %c8_i32 : i32
    %2 = tpu.iota {dimensions = array<i32: 1>} : vector<2x32xi32>
    %c0_i32 = arith.constant 0 : i32
    %3 = vector.broadcast %c0_i32 : i32 to vector<2x32xi32>
    %4 = arith.cmpi eq, %2, %3 : vector<2x32xi32>
    %cst = arith.constant 1.000000e+00 : f32
    %cst_0 = arith.constant 0.000000e+00 : f32
    %5 = vector.broadcast %cst : f32 to vector<2x32xf32>
    %6 = vector.broadcast %cst_0 : f32 to vector<2x32xf32>
    %7 = arith.select %4, %5, %6 : vector<2x32xi1>, vector<2x32xf32>
    %c0_i32_1 = arith.constant 0 : i32
    %8 = arith.cmpi eq, %arg1, %c0_i32_1 : i32
    %9 = arith.extui %8 : i1 to i32
    %c0_i32_2 = arith.constant 0 : i32
    %10 = arith.cmpi ne, %9, %c0_i32_2 : i32
    scf.if %10 {
      %c0_140 = arith.constant 0 : index
      %c0_141 = arith.constant 0 : index
      %239 = vector.load %arg5[%c0_140, %c0_141] : memref<2x32xf32, #tpu.memory_space<vmem>>, vector<2x32xf32>
      tpu.vector_store %arg5[%c0_140, %c0_141], %7 {strides = array<i32>} : memref<2x32xf32, #tpu.memory_space<vmem>>, vector<2x32xf32>,
    } else {
    }
    %c0 = arith.constant 0 : index
    %c0_3 = arith.constant 0 : index
    %11 = vector.load %arg5[%c0, %c0_3] : memref<2x32xf32, #tpu.memory_space<vmem>>, vector<1x32xf32>
    %c1 = arith.constant 1 : index
    %c0_4 = arith.constant 0 : index
    %12 = vector.load %arg5[%c1, %c0_4] : memref<2x32xf32, #tpu.memory_space<vmem>>, vector<1x32xf32>
    %c0_i32_5 = arith.constant 0 : i32
    %13 = arith.addi %0, %c0_i32_5 : i32
    %c0_i32_6 = arith.constant 0 : i32
    %14 = arith.addi %1, %c0_i32_6 : i32
    %15 = arith.index_cast %13 : i32 to index
    %16 = arith.index_cast %14 : i32 to index
    %17 = memref.load %arg2[%15, %16] : memref<2x8xi32, #tpu.memory_space<smem>>
    %18 = arith.index_cast %17 : i32 to index
    %c0_7 = arith.constant 0 : index
    %c0_8 = arith.constant 0 : index
    %19 = vector.load %arg3[%18, %c0_7, %c0_8] : memref<16x32x32xf32, #tpu.memory_space<vmem>>, vector<1x32x32xf32>
    %20 = vector.shape_cast %19 : vector<1x32x32xf32> to vector<32x32xf32>
    %cst_9 = arith.constant dense<0.000000e+00> : vector<1x32xf32>
    %21 = tpu.matmul %11, %20, %cst_9 {dimension_numbers = #tpu.dot_dimension_numbers<[1], [0], [0], [1], [0, 0, 1, 1], [], []>} : vector<1x32xf32>, vector<32x32xf32>, vector<1x32xf32> -> vector<1x32xf32>
    %cst_10 = arith.constant -1.000000e+01 : f32
    %cst_11 = arith.constant 1.000000e+01 : f32
    %22 = vector.broadcast %cst_10 : f32 to vector<1x32xf32>
    %23 = arith.maximumf %22, %21 : vector<1x32xf32>
    %24 = vector.broadcast %cst_11 : f32 to vector<1x32xf32>
    %25 = arith.minimumf %24, %23 : vector<1x32xf32>
    %c0_12 = arith.constant 0 : index
    %c0_13 = arith.constant 0 : index
    %26 = vector.load %arg4[%c0_12, %c0_13] : memref<2x256xf32, #tpu.memory_space<vmem>>, vector<1x32xf32>
    tpu.vector_store %arg4[%c0_12, %c0_13], %25 {strides = array<i32>} : memref<2x256xf32, #tpu.memory_space<vmem>>, vector<1x32xf32>,
    %c1_i32 = arith.constant 1 : i32
    %27 = arith.addi %0, %c1_i32 : i32
    %c0_i32_14 = arith.constant 0 : i32
    %28 = arith.addi %1, %c0_i32_14 : i32
    %29 = arith.index_cast %27 : i32 to index
    %30 = arith.index_cast %28 : i32 to index
    %31 = memref.load %arg2[%29, %30] : memref<2x8xi32, #tpu.memory_space<smem>>
    %32 = arith.index_cast %31 : i32 to index
    %c0_15 = arith.constant 0 : index
    %c0_16 = arith.constant 0 : index
    %33 = vector.load %arg3[%32, %c0_15, %c0_16] : memref<16x32x32xf32, #tpu.memory_space<vmem>>, vector<1x32x32xf32>
    %34 = vector.shape_cast %33 : vector<1x32x32xf32> to vector<32x32xf32>
    %cst_17 = arith.constant dense<0.000000e+00> : vector<1x32xf32>
    %35 = tpu.matmul %12, %34, %cst_17 {dimension_numbers = #tpu.dot_dimension_numbers<[1], [0], [0], [1], [0, 0, 1, 1], [], []>} : vector<1x32xf32>, vector<32x32xf32>, vector<1x32xf32> -> vector<1x32xf32>
    %cst_18 = arith.constant -1.000000e+01 : f32
    %cst_19 = arith.constant 1.000000e+01 : f32
    %36 = vector.broadcast %cst_18 : f32 to vector<1x32xf32>
    %37 = arith.maximumf %36, %35 : vector<1x32xf32>
    %38 = vector.broadcast %cst_19 : f32 to vector<1x32xf32>
    %39 = arith.minimumf %38, %37 : vector<1x32xf32>
    %c1_20 = arith.constant 1 : index
    %c0_21 = arith.constant 0 : index
    %40 = vector.load %arg4[%c1_20, %c0_21] : memref<2x256xf32, #tpu.memory_space<vmem>>, vector<1x32xf32>
    tpu.vector_store %arg4[%c1_20, %c0_21], %39 {strides = array<i32>} : memref<2x256xf32, #tpu.memory_space<vmem>>, vector<1x32xf32>,
    %c0_i32_22 = arith.constant 0 : i32
    %41 = arith.addi %0, %c0_i32_22 : i32
    %c1_i32_23 = arith.constant 1 : i32
    %42 = arith.addi %1, %c1_i32_23 : i32
    %43 = arith.index_cast %41 : i32 to index
    %44 = arith.index_cast %42 : i32 to index
    %45 = memref.load %arg2[%43, %44] : memref<2x8xi32, #tpu.memory_space<smem>>
    %46 = arith.index_cast %45 : i32 to index
    %c0_24 = arith.constant 0 : index
    %c0_25 = arith.constant 0 : index
    %47 = vector.load %arg3[%46, %c0_24, %c0_25] : memref<16x32x32xf32, #tpu.memory_space<vmem>>, vector<1x32x32xf32>
    %48 = vector.shape_cast %47 : vector<1x32x32xf32> to vector<32x32xf32>
    %cst_26 = arith.constant dense<0.000000e+00> : vector<1x32xf32>
    %49 = tpu.matmul %25, %48, %cst_26 {dimension_numbers = #tpu.dot_dimension_numbers<[1], [0], [0], [1], [0, 0, 1, 1], [], []>} : vector<1x32xf32>, vector<32x32xf32>, vector<1x32xf32> -> vector<1x32xf32>
    %cst_27 = arith.constant -1.000000e+01 : f32
    %cst_28 = arith.constant 1.000000e+01 : f32
    %50 = vector.broadcast %cst_27 : f32 to vector<1x32xf32>
    %51 = arith.maximumf %50, %49 : vector<1x32xf32>
    %52 = vector.broadcast %cst_28 : f32 to vector<1x32xf32>
    %53 = arith.minimumf %52, %51 : vector<1x32xf32>
    %c0_29 = arith.constant 0 : index
    %c32 = arith.constant 32 : index
    %54 = vector.load %arg4[%c0_29, %c32] : memref<2x256xf32, #tpu.memory_space<vmem>>, vector<1x32xf32>
    tpu.vector_store %arg4[%c0_29, %c32], %53 {strides = array<i32>} : memref<2x256xf32, #tpu.memory_space<vmem>>, vector<1x32xf32>,
    %c1_i32_30 = arith.constant 1 : i32
    %55 = arith.addi %0, %c1_i32_30 : i32
    %c1_i32_31 = arith.constant 1 : i32
    %56 = arith.addi %1, %c1_i32_31 : i32
    %57 = arith.index_cast %55 : i32 to index
    %58 = arith.index_cast %56 : i32 to index
    %59 = memref.load %arg2[%57, %58] : memref<2x8xi32, #tpu.memory_space<smem>>
    %60 = arith.index_cast %59 : i32 to index
    %c0_32 = arith.constant 0 : index
    %c0_33 = arith.constant 0 : index
    %61 = vector.load %arg3[%60, %c0_32, %c0_33] : memref<16x32x32xf32, #tpu.memory_space<vmem>>, vector<1x32x32xf32>
    %62 = vector.shape_cast %61 : vector<1x32x32xf32> to vector<32x32xf32>
    %cst_34 = arith.constant dense<0.000000e+00> : vector<1x32xf32>
    %63 = tpu.matmul %39, %62, %cst_34 {dimension_numbers = #tpu.dot_dimension_numbers<[1], [0], [0], [1], [0, 0, 1, 1], [], []>} : vector<1x32xf32>, vector<32x32xf32>, vector<1x32xf32> -> vector<1x32xf32>
    %cst_35 = arith.constant -1.000000e+01 : f32
    %cst_36 = arith.constant 1.000000e+01 : f32
    %64 = vector.broadcast %cst_35 : f32 to vector<1x32xf32>
    %65 = arith.maximumf %64, %63 : vector<1x32xf32>
    %66 = vector.broadcast %cst_36 : f32 to vector<1x32xf32>
    %67 = arith.minimumf %66, %65 : vector<1x32xf32>
    %c1_37 = arith.constant 1 : index
    %c32_38 = arith.constant 32 : index
    %68 = vector.load %arg4[%c1_37, %c32_38] : memref<2x256xf32, #tpu.memory_space<vmem>>, vector<1x32xf32>
    tpu.vector_store %arg4[%c1_37, %c32_38], %67 {strides = array<i32>} : memref<2x256xf32, #tpu.memory_space<vmem>>, vector<1x32xf32>,
    %c0_i32_39 = arith.constant 0 : i32
    %69 = arith.addi %0, %c0_i32_39 : i32
    %c2_i32_40 = arith.constant 2 : i32
    %70 = arith.addi %1, %c2_i32_40 : i32
    %71 = arith.index_cast %69 : i32 to index
    %72 = arith.index_cast %70 : i32 to index
    %73 = memref.load %arg2[%71, %72] : memref<2x8xi32, #tpu.memory_space<smem>>
    %74 = arith.index_cast %73 : i32 to index
    %c0_41 = arith.constant 0 : index
    %c0_42 = arith.constant 0 : index
    %75 = vector.load %arg3[%74, %c0_41, %c0_42] : memref<16x32x32xf32, #tpu.memory_space<vmem>>, vector<1x32x32xf32>
    %76 = vector.shape_cast %75 : vector<1x32x32xf32> to vector<32x32xf32>
    %cst_43 = arith.constant dense<0.000000e+00> : vector<1x32xf32>
    %77 = tpu.matmul %53, %76, %cst_43 {dimension_numbers = #tpu.dot_dimension_numbers<[1], [0], [0], [1], [0, 0, 1, 1], [], []>} : vector<1x32xf32>, vector<32x32xf32>, vector<1x32xf32> -> vector<1x32xf32>
    %cst_44 = arith.constant -1.000000e+01 : f32
    %cst_45 = arith.constant 1.000000e+01 : f32
    %78 = vector.broadcast %cst_44 : f32 to vector<1x32xf32>
    %79 = arith.maximumf %78, %77 : vector<1x32xf32>
    %80 = vector.broadcast %cst_45 : f32 to vector<1x32xf32>
    %81 = arith.minimumf %80, %79 : vector<1x32xf32>
    %c0_46 = arith.constant 0 : index
    %c64 = arith.constant 64 : index
    %82 = vector.load %arg4[%c0_46, %c64] : memref<2x256xf32, #tpu.memory_space<vmem>>, vector<1x32xf32>
    tpu.vector_store %arg4[%c0_46, %c64], %81 {strides = array<i32>} : memref<2x256xf32, #tpu.memory_space<vmem>>, vector<1x32xf32>,
    %c1_i32_47 = arith.constant 1 : i32
    %83 = arith.addi %0, %c1_i32_47 : i32
    %c2_i32_48 = arith.constant 2 : i32
    %84 = arith.addi %1, %c2_i32_48 : i32
    %85 = arith.index_cast %83 : i32 to index
    %86 = arith.index_cast %84 : i32 to index
    %87 = memref.load %arg2[%85, %86] : memref<2x8xi32, #tpu.memory_space<smem>>
    %88 = arith.index_cast %87 : i32 to index
    %c0_49 = arith.constant 0 : index
    %c0_50 = arith.constant 0 : index
    %89 = vector.load %arg3[%88, %c0_49, %c0_50] : memref<16x32x32xf32, #tpu.memory_space<vmem>>, vector<1x32x32xf32>
    %90 = vector.shape_cast %89 : vector<1x32x32xf32> to vector<32x32xf32>
    %cst_51 = arith.constant dense<0.000000e+00> : vector<1x32xf32>
    %91 = tpu.matmul %67, %90, %cst_51 {dimension_numbers = #tpu.dot_dimension_numbers<[1], [0], [0], [1], [0, 0, 1, 1], [], []>} : vector<1x32xf32>, vector<32x32xf32>, vector<1x32xf32> -> vector<1x32xf32>
    %cst_52 = arith.constant -1.000000e+01 : f32
    %cst_53 = arith.constant 1.000000e+01 : f32
    %92 = vector.broadcast %cst_52 : f32 to vector<1x32xf32>
    %93 = arith.maximumf %92, %91 : vector<1x32xf32>
    %94 = vector.broadcast %cst_53 : f32 to vector<1x32xf32>
    %95 = arith.minimumf %94, %93 : vector<1x32xf32>
    %c1_54 = arith.constant 1 : index
    %c64_55 = arith.constant 64 : index
    %96 = vector.load %arg4[%c1_54, %c64_55] : memref<2x256xf32, #tpu.memory_space<vmem>>, vector<1x32xf32>
    tpu.vector_store %arg4[%c1_54, %c64_55], %95 {strides = array<i32>} : memref<2x256xf32, #tpu.memory_space<vmem>>, vector<1x32xf32>,
    %c0_i32_56 = arith.constant 0 : i32
    %97 = arith.addi %0, %c0_i32_56 : i32
    %c3_i32 = arith.constant 3 : i32
    %98 = arith.addi %1, %c3_i32 : i32
    %99 = arith.index_cast %97 : i32 to index
    %100 = arith.index_cast %98 : i32 to index
    %101 = memref.load %arg2[%99, %100] : memref<2x8xi32, #tpu.memory_space<smem>>
    %102 = arith.index_cast %101 : i32 to index
    %c0_57 = arith.constant 0 : index
    %c0_58 = arith.constant 0 : index
    %103 = vector.load %arg3[%102, %c0_57, %c0_58] : memref<16x32x32xf32, #tpu.memory_space<vmem>>, vector<1x32x32xf32>
    %104 = vector.shape_cast %103 : vector<1x32x32xf32> to vector<32x32xf32>
    %cst_59 = arith.constant dense<0.000000e+00> : vector<1x32xf32>
    %105 = tpu.matmul %81, %104, %cst_59 {dimension_numbers = #tpu.dot_dimension_numbers<[1], [0], [0], [1], [0, 0, 1, 1], [], []>} : vector<1x32xf32>, vector<32x32xf32>, vector<1x32xf32> -> vector<1x32xf32>
    %cst_60 = arith.constant -1.000000e+01 : f32
    %cst_61 = arith.constant 1.000000e+01 : f32
    %106 = vector.broadcast %cst_60 : f32 to vector<1x32xf32>
    %107 = arith.maximumf %106, %105 : vector<1x32xf32>
    %108 = vector.broadcast %cst_61 : f32 to vector<1x32xf32>
    %109 = arith.minimumf %108, %107 : vector<1x32xf32>
    %c0_62 = arith.constant 0 : index
    %c96 = arith.constant 96 : index
    %110 = vector.load %arg4[%c0_62, %c96] : memref<2x256xf32, #tpu.memory_space<vmem>>, vector<1x32xf32>
    tpu.vector_store %arg4[%c0_62, %c96], %109 {strides = array<i32>} : memref<2x256xf32, #tpu.memory_space<vmem>>, vector<1x32xf32>,
    %c1_i32_63 = arith.constant 1 : i32
    %111 = arith.addi %0, %c1_i32_63 : i32
    %c3_i32_64 = arith.constant 3 : i32
    %112 = arith.addi %1, %c3_i32_64 : i32
    %113 = arith.index_cast %111 : i32 to index
    %114 = arith.index_cast %112 : i32 to index
    %115 = memref.load %arg2[%113, %114] : memref<2x8xi32, #tpu.memory_space<smem>>
    %116 = arith.index_cast %115 : i32 to index
    %c0_65 = arith.constant 0 : index
    %c0_66 = arith.constant 0 : index
    %117 = vector.load %arg3[%116, %c0_65, %c0_66] : memref<16x32x32xf32, #tpu.memory_space<vmem>>, vector<1x32x32xf32>
    %118 = vector.shape_cast %117 : vector<1x32x32xf32> to vector<32x32xf32>
    %cst_67 = arith.constant dense<0.000000e+00> : vector<1x32xf32>
    %119 = tpu.matmul %95, %118, %cst_67 {dimension_numbers = #tpu.dot_dimension_numbers<[1], [0], [0], [1], [0, 0, 1, 1], [], []>} : vector<1x32xf32>, vector<32x32xf32>, vector<1x32xf32> -> vector<1x32xf32>
    %cst_68 = arith.constant -1.000000e+01 : f32
    %cst_69 = arith.constant 1.000000e+01 : f32
    %120 = vector.broadcast %cst_68 : f32 to vector<1x32xf32>
    %121 = arith.maximumf %120, %119 : vector<1x32xf32>
    %122 = vector.broadcast %cst_69 : f32 to vector<1x32xf32>
    %123 = arith.minimumf %122, %121 : vector<1x32xf32>
    %c1_70 = arith.constant 1 : index
    %c96_71 = arith.constant 96 : index
    %124 = vector.load %arg4[%c1_70, %c96_71] : memref<2x256xf32, #tpu.memory_space<vmem>>, vector<1x32xf32>
    tpu.vector_store %arg4[%c1_70, %c96_71], %123 {strides = array<i32>} : memref<2x256xf32, #tpu.memory_space<vmem>>, vector<1x32xf32>,
    %c0_i32_72 = arith.constant 0 : i32
    %125 = arith.addi %0, %c0_i32_72 : i32
    %c4_i32 = arith.constant 4 : i32
    %126 = arith.addi %1, %c4_i32 : i32
    %127 = arith.index_cast %125 : i32 to index
    %128 = arith.index_cast %126 : i32 to index
    %129 = memref.load %arg2[%127, %128] : memref<2x8xi32, #tpu.memory_space<smem>>
    %130 = arith.index_cast %129 : i32 to index
    %c0_73 = arith.constant 0 : index
    %c0_74 = arith.constant 0 : index
    %131 = vector.load %arg3[%130, %c0_73, %c0_74] : memref<16x32x32xf32, #tpu.memory_space<vmem>>, vector<1x32x32xf32>
    %132 = vector.shape_cast %131 : vector<1x32x32xf32> to vector<32x32xf32>
    %cst_75 = arith.constant dense<0.000000e+00> : vector<1x32xf32>
    %133 = tpu.matmul %109, %132, %cst_75 {dimension_numbers = #tpu.dot_dimension_numbers<[1], [0], [0], [1], [0, 0, 1, 1], [], []>} : vector<1x32xf32>, vector<32x32xf32>, vector<1x32xf32> -> vector<1x32xf32>
    %cst_76 = arith.constant -1.000000e+01 : f32
    %cst_77 = arith.constant 1.000000e+01 : f32
    %134 = vector.broadcast %cst_76 : f32 to vector<1x32xf32>
    %135 = arith.maximumf %134, %133 : vector<1x32xf32>
    %136 = vector.broadcast %cst_77 : f32 to vector<1x32xf32>
    %137 = arith.minimumf %136, %135 : vector<1x32xf32>
    %c0_78 = arith.constant 0 : index
    %c128 = arith.constant 128 : index
    %138 = vector.load %arg4[%c0_78, %c128] : memref<2x256xf32, #tpu.memory_space<vmem>>, vector<1x32xf32>
    tpu.vector_store %arg4[%c0_78, %c128], %137 {strides = array<i32>} : memref<2x256xf32, #tpu.memory_space<vmem>>, vector<1x32xf32>,
    %c1_i32_79 = arith.constant 1 : i32
    %139 = arith.addi %0, %c1_i32_79 : i32
    %c4_i32_80 = arith.constant 4 : i32
    %140 = arith.addi %1, %c4_i32_80 : i32
    %141 = arith.index_cast %139 : i32 to index
    %142 = arith.index_cast %140 : i32 to index
    %143 = memref.load %arg2[%141, %142] : memref<2x8xi32, #tpu.memory_space<smem>>
    %144 = arith.index_cast %143 : i32 to index
    %c0_81 = arith.constant 0 : index
    %c0_82 = arith.constant 0 : index
    %145 = vector.load %arg3[%144, %c0_81, %c0_82] : memref<16x32x32xf32, #tpu.memory_space<vmem>>, vector<1x32x32xf32>
    %146 = vector.shape_cast %145 : vector<1x32x32xf32> to vector<32x32xf32>
    %cst_83 = arith.constant dense<0.000000e+00> : vector<1x32xf32>
    %147 = tpu.matmul %123, %146, %cst_83 {dimension_numbers = #tpu.dot_dimension_numbers<[1], [0], [0], [1], [0, 0, 1, 1], [], []>} : vector<1x32xf32>, vector<32x32xf32>, vector<1x32xf32> -> vector<1x32xf32>
    %cst_84 = arith.constant -1.000000e+01 : f32
    %cst_85 = arith.constant 1.000000e+01 : f32
    %148 = vector.broadcast %cst_84 : f32 to vector<1x32xf32>
    %149 = arith.maximumf %148, %147 : vector<1x32xf32>
    %150 = vector.broadcast %cst_85 : f32 to vector<1x32xf32>
    %151 = arith.minimumf %150, %149 : vector<1x32xf32>
    %c1_86 = arith.constant 1 : index
    %c128_87 = arith.constant 128 : index
    %152 = vector.load %arg4[%c1_86, %c128_87] : memref<2x256xf32, #tpu.memory_space<vmem>>, vector<1x32xf32>
    tpu.vector_store %arg4[%c1_86, %c128_87], %151 {strides = array<i32>} : memref<2x256xf32, #tpu.memory_space<vmem>>, vector<1x32xf32>,
    %c0_i32_88 = arith.constant 0 : i32
    %153 = arith.addi %0, %c0_i32_88 : i32
    %c5_i32 = arith.constant 5 : i32
    %154 = arith.addi %1, %c5_i32 : i32
    %155 = arith.index_cast %153 : i32 to index
    %156 = arith.index_cast %154 : i32 to index
    %157 = memref.load %arg2[%155, %156] : memref<2x8xi32, #tpu.memory_space<smem>>
    %158 = arith.index_cast %157 : i32 to index
    %c0_89 = arith.constant 0 : index
    %c0_90 = arith.constant 0 : index
    %159 = vector.load %arg3[%158, %c0_89, %c0_90] : memref<16x32x32xf32, #tpu.memory_space<vmem>>, vector<1x32x32xf32>
    %160 = vector.shape_cast %159 : vector<1x32x32xf32> to vector<32x32xf32>
    %cst_91 = arith.constant dense<0.000000e+00> : vector<1x32xf32>
    %161 = tpu.matmul %137, %160, %cst_91 {dimension_numbers = #tpu.dot_dimension_numbers<[1], [0], [0], [1], [0, 0, 1, 1], [], []>} : vector<1x32xf32>, vector<32x32xf32>, vector<1x32xf32> -> vector<1x32xf32>
    %cst_92 = arith.constant -1.000000e+01 : f32
    %cst_93 = arith.constant 1.000000e+01 : f32
    %162 = vector.broadcast %cst_92 : f32 to vector<1x32xf32>
    %163 = arith.maximumf %162, %161 : vector<1x32xf32>
    %164 = vector.broadcast %cst_93 : f32 to vector<1x32xf32>
    %165 = arith.minimumf %164, %163 : vector<1x32xf32>
    %c0_94 = arith.constant 0 : index
    %c160 = arith.constant 160 : index
    %166 = vector.load %arg4[%c0_94, %c160] : memref<2x256xf32, #tpu.memory_space<vmem>>, vector<1x32xf32>
    tpu.vector_store %arg4[%c0_94, %c160], %165 {strides = array<i32>} : memref<2x256xf32, #tpu.memory_space<vmem>>, vector<1x32xf32>,
    %c1_i32_95 = arith.constant 1 : i32
    %167 = arith.addi %0, %c1_i32_95 : i32
    %c5_i32_96 = arith.constant 5 : i32
    %168 = arith.addi %1, %c5_i32_96 : i32
    %169 = arith.index_cast %167 : i32 to index
    %170 = arith.index_cast %168 : i32 to index
    %171 = memref.load %arg2[%169, %170] : memref<2x8xi32, #tpu.memory_space<smem>>
    %172 = arith.index_cast %171 : i32 to index
    %c0_97 = arith.constant 0 : index
    %c0_98 = arith.constant 0 : index
    %173 = vector.load %arg3[%172, %c0_97, %c0_98] : memref<16x32x32xf32, #tpu.memory_space<vmem>>, vector<1x32x32xf32>
    %174 = vector.shape_cast %173 : vector<1x32x32xf32> to vector<32x32xf32>
    %cst_99 = arith.constant dense<0.000000e+00> : vector<1x32xf32>
    %175 = tpu.matmul %151, %174, %cst_99 {dimension_numbers = #tpu.dot_dimension_numbers<[1], [0], [0], [1], [0, 0, 1, 1], [], []>} : vector<1x32xf32>, vector<32x32xf32>, vector<1x32xf32> -> vector<1x32xf32>
    %cst_100 = arith.constant -1.000000e+01 : f32
    %cst_101 = arith.constant 1.000000e+01 : f32
    %176 = vector.broadcast %cst_100 : f32 to vector<1x32xf32>
    %177 = arith.maximumf %176, %175 : vector<1x32xf32>
    %178 = vector.broadcast %cst_101 : f32 to vector<1x32xf32>
    %179 = arith.minimumf %178, %177 : vector<1x32xf32>
    %c1_102 = arith.constant 1 : index
    %c160_103 = arith.constant 160 : index
    %180 = vector.load %arg4[%c1_102, %c160_103] : memref<2x256xf32, #tpu.memory_space<vmem>>, vector<1x32xf32>
    tpu.vector_store %arg4[%c1_102, %c160_103], %179 {strides = array<i32>} : memref<2x256xf32, #tpu.memory_space<vmem>>, vector<1x32xf32>,
    %c0_i32_104 = arith.constant 0 : i32
    %181 = arith.addi %0, %c0_i32_104 : i32
    %c6_i32 = arith.constant 6 : i32
    %182 = arith.addi %1, %c6_i32 : i32
    %183 = arith.index_cast %181 : i32 to index
    %184 = arith.index_cast %182 : i32 to index
    %185 = memref.load %arg2[%183, %184] : memref<2x8xi32, #tpu.memory_space<smem>>
    %186 = arith.index_cast %185 : i32 to index
    %c0_105 = arith.constant 0 : index
    %c0_106 = arith.constant 0 : index
    %187 = vector.load %arg3[%186, %c0_105, %c0_106] : memref<16x32x32xf32, #tpu.memory_space<vmem>>, vector<1x32x32xf32>
    %188 = vector.shape_cast %187 : vector<1x32x32xf32> to vector<32x32xf32>
    %cst_107 = arith.constant dense<0.000000e+00> : vector<1x32xf32>
    %189 = tpu.matmul %165, %188, %cst_107 {dimension_numbers = #tpu.dot_dimension_numbers<[1], [0], [0], [1], [0, 0, 1, 1], [], []>} : vector<1x32xf32>, vector<32x32xf32>, vector<1x32xf32> -> vector<1x32xf32>
    %cst_108 = arith.constant -1.000000e+01 : f32
    %cst_109 = arith.constant 1.000000e+01 : f32
    %190 = vector.broadcast %cst_108 : f32 to vector<1x32xf32>
    %191 = arith.maximumf %190, %189 : vector<1x32xf32>
    %192 = vector.broadcast %cst_109 : f32 to vector<1x32xf32>
    %193 = arith.minimumf %192, %191 : vector<1x32xf32>
    %c0_110 = arith.constant 0 : index
    %c192 = arith.constant 192 : index
    %194 = vector.load %arg4[%c0_110, %c192] : memref<2x256xf32, #tpu.memory_space<vmem>>, vector<1x32xf32>
    tpu.vector_store %arg4[%c0_110, %c192], %193 {strides = array<i32>} : memref<2x256xf32, #tpu.memory_space<vmem>>, vector<1x32xf32>,
    %c1_i32_111 = arith.constant 1 : i32
    %195 = arith.addi %0, %c1_i32_111 : i32
    %c6_i32_112 = arith.constant 6 : i32
    %196 = arith.addi %1, %c6_i32_112 : i32
    %197 = arith.index_cast %195 : i32 to index
    %198 = arith.index_cast %196 : i32 to index
    %199 = memref.load %arg2[%197, %198] : memref<2x8xi32, #tpu.memory_space<smem>>
    %200 = arith.index_cast %199 : i32 to index
    %c0_113 = arith.constant 0 : index
    %c0_114 = arith.constant 0 : index
    %201 = vector.load %arg3[%200, %c0_113, %c0_114] : memref<16x32x32xf32, #tpu.memory_space<vmem>>, vector<1x32x32xf32>
    %202 = vector.shape_cast %201 : vector<1x32x32xf32> to vector<32x32xf32>
    %cst_115 = arith.constant dense<0.000000e+00> : vector<1x32xf32>
    %203 = tpu.matmul %179, %202, %cst_115 {dimension_numbers = #tpu.dot_dimension_numbers<[1], [0], [0], [1], [0, 0, 1, 1], [], []>} : vector<1x32xf32>, vector<32x32xf32>, vector<1x32xf32> -> vector<1x32xf32>
    %cst_116 = arith.constant -1.000000e+01 : f32
    %cst_117 = arith.constant 1.000000e+01 : f32
    %204 = vector.broadcast %cst_116 : f32 to vector<1x32xf32>
    %205 = arith.maximumf %204, %203 : vector<1x32xf32>
    %206 = vector.broadcast %cst_117 : f32 to vector<1x32xf32>
    %207 = arith.minimumf %206, %205 : vector<1x32xf32>
    %c1_118 = arith.constant 1 : index
    %c192_119 = arith.constant 192 : index
    %208 = vector.load %arg4[%c1_118, %c192_119] : memref<2x256xf32, #tpu.memory_space<vmem>>, vector<1x32xf32>
    tpu.vector_store %arg4[%c1_118, %c192_119], %207 {strides = array<i32>} : memref<2x256xf32, #tpu.memory_space<vmem>>, vector<1x32xf32>,
    %c0_i32_120 = arith.constant 0 : i32
    %209 = arith.addi %0, %c0_i32_120 : i32
    %c7_i32 = arith.constant 7 : i32
    %210 = arith.addi %1, %c7_i32 : i32
    %211 = arith.index_cast %209 : i32 to index
    %212 = arith.index_cast %210 : i32 to index
    %213 = memref.load %arg2[%211, %212] : memref<2x8xi32, #tpu.memory_space<smem>>
    %214 = arith.index_cast %213 : i32 to index
    %c0_121 = arith.constant 0 : index
    %c0_122 = arith.constant 0 : index
    %215 = vector.load %arg3[%214, %c0_121, %c0_122] : memref<16x32x32xf32, #tpu.memory_space<vmem>>, vector<1x32x32xf32>
    %216 = vector.shape_cast %215 : vector<1x32x32xf32> to vector<32x32xf32>
    %cst_123 = arith.constant dense<0.000000e+00> : vector<1x32xf32>
    %217 = tpu.matmul %193, %216, %cst_123 {dimension_numbers = #tpu.dot_dimension_numbers<[1], [0], [0], [1], [0, 0, 1, 1], [], []>} : vector<1x32xf32>, vector<32x32xf32>, vector<1x32xf32> -> vector<1x32xf32>
    %cst_124 = arith.constant -1.000000e+01 : f32
    %cst_125 = arith.constant 1.000000e+01 : f32
    %218 = vector.broadcast %cst_124 : f32 to vector<1x32xf32>
    %219 = arith.maximumf %218, %217 : vector<1x32xf32>
    %220 = vector.broadcast %cst_125 : f32 to vector<1x32xf32>
    %221 = arith.minimumf %220, %219 : vector<1x32xf32>
    %c0_126 = arith.constant 0 : index
    %c224 = arith.constant 224 : index
    %222 = vector.load %arg4[%c0_126, %c224] : memref<2x256xf32, #tpu.memory_space<vmem>>, vector<1x32xf32>
    tpu.vector_store %arg4[%c0_126, %c224], %221 {strides = array<i32>} : memref<2x256xf32, #tpu.memory_space<vmem>>, vector<1x32xf32>,
    %c1_i32_127 = arith.constant 1 : i32
    %223 = arith.addi %0, %c1_i32_127 : i32
    %c7_i32_128 = arith.constant 7 : i32
    %224 = arith.addi %1, %c7_i32_128 : i32
    %225 = arith.index_cast %223 : i32 to index
    %226 = arith.index_cast %224 : i32 to index
    %227 = memref.load %arg2[%225, %226] : memref<2x8xi32, #tpu.memory_space<smem>>
    %228 = arith.index_cast %227 : i32 to index
    %c0_129 = arith.constant 0 : index
    %c0_130 = arith.constant 0 : index
    %229 = vector.load %arg3[%228, %c0_129, %c0_130] : memref<16x32x32xf32, #tpu.memory_space<vmem>>, vector<1x32x32xf32>
    %230 = vector.shape_cast %229 : vector<1x32x32xf32> to vector<32x32xf32>
    %cst_131 = arith.constant dense<0.000000e+00> : vector<1x32xf32>
    %231 = tpu.matmul %207, %230, %cst_131 {dimension_numbers = #tpu.dot_dimension_numbers<[1], [0], [0], [1], [0, 0, 1, 1], [], []>} : vector<1x32xf32>, vector<32x32xf32>, vector<1x32xf32> -> vector<1x32xf32>
    %cst_132 = arith.constant -1.000000e+01 : f32
    %cst_133 = arith.constant 1.000000e+01 : f32
    %232 = vector.broadcast %cst_132 : f32 to vector<1x32xf32>
    %233 = arith.maximumf %232, %231 : vector<1x32xf32>
    %234 = vector.broadcast %cst_133 : f32 to vector<1x32xf32>
    %235 = arith.minimumf %234, %233 : vector<1x32xf32>
    %c1_134 = arith.constant 1 : index
    %c224_135 = arith.constant 224 : index
    %236 = vector.load %arg4[%c1_134, %c224_135] : memref<2x256xf32, #tpu.memory_space<vmem>>, vector<1x32xf32>
    tpu.vector_store %arg4[%c1_134, %c224_135], %235 {strides = array<i32>} : memref<2x256xf32, #tpu.memory_space<vmem>>, vector<1x32xf32>,
    %c0_136 = arith.constant 0 : index
    %c0_137 = arith.constant 0 : index
    %237 = vector.load %arg5[%c0_136, %c0_137] : memref<2x32xf32, #tpu.memory_space<vmem>>, vector<1x32xf32>
    tpu.vector_store %arg5[%c0_136, %c0_137], %221 {strides = array<i32>} : memref<2x32xf32, #tpu.memory_space<vmem>>, vector<1x32xf32>,
    %c1_138 = arith.constant 1 : index
    %c0_139 = arith.constant 0 : index
    %238 = vector.load %arg5[%c1_138, %c0_139] : memref<2x32xf32, #tpu.memory_space<vmem>>, vector<1x32xf32>
    tpu.vector_store %arg5[%c1_138, %c0_139], %235 {strides = array<i32>} : memref<2x32xf32, #tpu.memory_space<vmem>>, vector<1x32xf32>,
    return
  }
  func.func @transform_0(%arg0: i32, %arg1: i32, %arg2: memref<2x8xi32, #tpu.memory_space<smem>>) -> (i32, i32, i32) {
    %c0_i32 = arith.constant 0 : i32
    %c0_i32_0 = arith.constant 0 : i32
    %c0_i32_1 = arith.constant 0 : i32
    %c0_i32_2 = arith.constant 0 : i32
    return %c0_i32, %c0_i32_0, %c0_i32_1 : i32, i32, i32
  }
  func.func @transform_1(%arg0: i32, %arg1: i32, %arg2: memref<2x8xi32, #tpu.memory_space<smem>>) -> (i32, i32) {
    %c0_i32 = arith.constant 0 : i32
    return %arg0, %arg1 : i32, i32
  }
}

</mosaic_0001>

<llo_original>
// kernel: tpu_custom_call.1
$region0: #{tpu_custom_call.1}
  #allocation0 [shape = 'u32[]', space=smem, size = 0x4, offset = 0x4, fixed_abs, tag = 'smem constant byte address 0x4 - core index']
  #allocation1 [shape = 'u32[144,128]{1,0:T(1,128)}', space=vmem, size = 0x12000, scoped, tag = 'internal scratch']
  #allocation2 [shape = 'f32[2,32]{1,0:T(2,128)}', space=vmem, size = 0x400, scoped, tag = 'scratch operand']
  #allocation3 [shape = 's32[1]{0}', space=sflag, size = 0x4, scoped, tag = 'scoped memory for tpu_custom_call.1']
  #allocation4 [shape = 'u8[1024]{0}', space=smem, size = 0x400, scoped, tag = 'prefetched SMEM operand 0']
  %s0 = inlined_call_operand.hbm [shape: s32[2,8], index: 0, kind: input, shape index: {}]
  %s1 = inlined_call_operand.hbm [shape: f32[16,32,32], index: 1, kind: input, shape index: {}]
  %s2 = inlined_call_operand.hbm [shape: f32[2,256], index: 2, kind: output, shape index: {}]
  %s3 = sld [smem:[#allocation0]]
  $region22: #{tpu_custom_call.1} parent=0
    _
  %s5 = ssub.s32 1, %s3
  %s6 = scalar_select 0, %s5, %s3
  %8 = dma.hbm_to_smem %s0, 32, [#allocation4], [#allocation3]
  %9 = dma.done [#allocation3], 32
  %10 = sfence
  $region1: #{tpu_custom_call.1} parent=0
    #allocation5 [shape = 'u8[262144]{0}', space=vmem, size = 0x40000, scoped, tag = 'input window, operand 1, single buffered']
    #allocation6 [shape = 's32[1]{0}', space=sflag, size = 0x4, scoped, tag = 'scoped memory for tpu_custom_call.1']
    #allocation7 [shape = 's32[1]{0}', space=sflag, size = 0x4, scoped, tag = 'scoped memory for tpu_custom_call.1']
    #allocation8 [shape = 'u8[2048]{0}', space=vmem, size = 0x800, scoped, tag = 'output window, operand 0, single buffered']
    %11 = vsyncpa [#allocation6], 0
    %12 = vsyncpa [#allocation7], 0
    // Predicated region
    $region2: #{tpu_custom_call.1} parent=1 // pred_check
      _
    $region3: #{tpu_custom_call.1} parent=1 // pred_check_branch
      %14 = sbr.rel (0) target = $region5
    $region4: #{tpu_custom_call.1} parent=1 // pred_region
      %s16 = ssub.s32 8192, 8192
      %17 = vsyncadd [#allocation6], %s16
      %s18 = sshll.u32 [#allocation5], 4
      %s19 = int_to_ptr.vmem [resolvable:$true] %s18
      %24 = dma.hbm_to_vmem [thread:$0]  %s1, 8192, %s19, [#allocation6], 128, 128, 8
    $region5: #{tpu_custom_call.1} parent=1 // pred_fallthru
      _
    // Predicated region
    $region6: #{tpu_custom_call.1} parent=1 // pred_check
      _
    $region7: #{tpu_custom_call.1} parent=1 // pred_check_branch
      %26 = sbr.rel (0) target = $region9
    $region8: #{tpu_custom_call.1} parent=1 // pred_region
      %27 = dma.done [#allocation6], 8192
    $region9: #{tpu_custom_call.1} parent=1 // pred_fallthru
      _
    %s28 = smul.u32 0, 2
    %s29 = smul.u32 0, 8
    %v30 = vlaneseq
    %v31 = vand.u32 %v30, 127
    %vm32 = vcmp.eq.s32.totalorder %v31, 0
    %v33 = vsel %vm32, 1.0, 0.0
    %p34 = scmp.eq.s32.totalorder 0, 0
    // Predicated region
    $region10: #{tpu_custom_call.1} parent=1 // pred_check
      %p35 = pneg %p34
    $region11: #{tpu_custom_call.1} parent=1 // pred_check_branch
      %37 = sbr.rel (%p35) target = $region13
    $region12: #{tpu_custom_call.1} parent=1 // pred_region
      %vm38 = vcmask 254976
      %39 = vst.msk [vmem:[#allocation2] sm:$0x3] %vm38, %v33
    $region13: #{tpu_custom_call.1} parent=1 // pred_fallthru
      _
    %v40 = vld [vmem:[#allocation2] sm:$0x1]
    %v41 = vld [vmem:[#allocation2 + $0x1] sm:$0x1]
    %s42 = sshra.s32 %s29, 7
    %s43 = sand.u32 %s29, 127
    %s44 = sadd.s32 %s42, %s28
    %s45 = smul.u32 %s44, 128
    %s46 = sshra.s32 %s29, 7
    %s47 = sand.u32 %s29, 127
    %s48 = sadd.s32 %s45, %s47
    %s49 = sld [smem:[#allocation4 + %s48]]
    %s50 = smul.u32 %s49, 32
    %s51 = scalar_lea.vmem [#allocation5], %s50
    %v52 = vld [vmem:[%s51] sm:$0xff]
    %v53 = vld [vmem:[%s51 + $0x8] sm:$0xff]
    %v54 = vld [vmem:[%s51 + $0x10] sm:$0xff]
    %v55 = vld [vmem:[%s51 + $0x18] sm:$0xff]
    %vm56 = vcmask 261120
    %v58 = vsel %vm56, %v40, 0
    %60 = vmatprep.subr.mxu0 0.0
    %61 = vmatpush1.msra.mxu0 %v52
    %62 = vmatprep.subr.mxu0 0.0
    %63 = vmatpush1.msra.mxu0 %v53
    %64 = vmatprep.subr.mxu0 0.0
    %65 = vmatpush1.msra.mxu0 %v54
    %66 = vmatprep.subr.mxu0 0.0
    %67 = vmatpush1.msra.mxu0 %v55
    %68 = vmatprep.subr.mxu0 0.0
    %69 = vmatpush1.msra.mxu0 0.0
    %70 = vmatprep.subr.mxu0 0.0
    %71 = vmatpush1.msra.mxu0 0.0
    %72 = vmatprep.subr.mxu0 0.0
    %73 = vmatpush1.msra.mxu0 0.0
    %74 = vmatprep.subr.mxu0 0.0
    %75 = vmatpush1.msra.mxu0 0.0
    %76 = vmatprep.subr.mxu0 0.0
    %77 = vmatpush1.msra.mxu0 0.0
    %78 = vmatprep.subr.mxu0 0.0
    %79 = vmatpush1.msra.mxu0 0.0
    %80 = vmatprep.subr.mxu0 0.0
    %81 = vmatpush1.msra.mxu0 0.0
    %82 = vmatprep.subr.mxu0 0.0
    %83 = vmatpush1.msra.mxu0 0.0
    %84 = vmatprep.subr.mxu0 0.0
    %85 = vmatpush1.msra.mxu0 0.0
    %86 = vmatprep.subr.mxu0 0.0
    %87 = vmatpush1.msra.mxu0 0.0
    %88 = vmatprep.subr.mxu0 0.0
    %89 = vmatpush1.msra.mxu0 0.0
    %90 = vmatprep.subr.mxu0 0.0
    %91 = vmatpush1.msra.mxu0 0.0
    %92 = vmatprep.subr.mxu0 0.0
    %93 = vmatpush1.msra.mxu0 0.0
    %94 = vmatprep.subr.mxu0 0.0
    %95 = vmatpush1.msra.mxu0 0.0
    %96 = vmatprep.subr.mxu0 0.0
    %97 = vmatpush1.msra.mxu0 0.0
    %98 = vmatprep.subr.mxu0 0.0
    %99 = vmatpush1.msra.mxu0 0.0
    %100 = vmatprep.subr.mxu0 0.0
    %101 = vmatpush1.msra.mxu0 0.0
    %102 = vmatprep.subr.mxu0 0.0
    %103 = vmatpush1.msra.mxu0 0.0
    %104 = vmatprep.subr.mxu0 0.0
    %105 = vmatpush1.msra.mxu0 0.0
    %106 = vmatprep.subr.mxu0 0.0
    %107 = vmatpush1.msra.mxu0 0.0
    %108 = vmatprep.subr.mxu0 0.0
    %109 = vmatpush1.msra.mxu0 0.0
    %110 = vmatprep.subr.mxu0 0.0
    %111 = vmatpush1.msra.mxu0 0.0
    %112 = vmatprep.subr.mxu0 0.0
    %113 = vmatpush1.msra.mxu0 0.0
    %114 = vmatprep.subr.mxu0 0.0
    %115 = vmatpush1.msra.mxu0 0.0
    %116 = vmatprep.subr.mxu0 0.0
    %117 = vmatpush1.msra.mxu0 0.0
    %118 = vmatprep.subr.mxu0 0.0
    %119 = vmatpush1.msra.mxu0 0.0
    %120 = vmatprep.subr.mxu0 0.0
    %121 = vmatpush1.msra.mxu0 0.0
    %122 = vmatprep.subr.mxu0 0.0
    %123 = vmatpush1.msra.mxu0 0.0
    %124 = vmatprep.mubr.f32.mxu0 0.0
    %125 = vmatmul.mubr.f32.gmra.mrb[0].mxu0 %v58
    %v126 = vpop.f32.mrb[0].mxu0
    %v127 = vadd.f32 0.0, %v126
    %v128 = vpop.f32.mrb[0].mxu0
    %129 = vdwg.mxu0
    %v130 = vmax.f32 %v127, -10.0
    %v131 = vmin.f32 %v130, 10.0
    %vm132 = vcmask 253952
    %133 = vst.msk [vmem:[#allocation8] sm:$0x1] %vm132, %v131
    %s134 = sadd.s32 %s28, 1
    %s135 = sadd.s32 %s42, %s134
    %s136 = smul.u32 %s135, 128
    %s137 = sadd.s32 %s136, %s47
    %s138 = sld [smem:[#allocation4 + %s137]]
    %s139 = smul.u32 %s138, 32
    %s140 = scalar_lea.vmem [#allocation5], %s139
    %v141 = vld [vmem:[%s140] sm:$0xff]
    %v142 = vld [vmem:[%s140 + $0x8] sm:$0xff]
    %v143 = vld [vmem:[%s140 + $0x10] sm:$0xff]
    %v144 = vld [vmem:[%s140 + $0x18] sm:$0xff]
    %v146 = vsel %vm56, %v41, 0
    %148 = vmatprep.subr.mxu0 0.0
    %149 = vmatpush1.msra.mxu0 %v141
    %150 = vmatprep.subr.mxu0 0.0
    %151 = vmatpush1.msra.mxu0 %v142
    %152 = vmatprep.subr.mxu0 0.0
    %153 = vmatpush1.msra.mxu0 %v143
    %154 = vmatprep.subr.mxu0 0.0
    %155 = vmatpush1.msra.mxu0 %v144
    %156 = vmatprep.subr.mxu0 0.0
    %157 = vmatpush1.msra.mxu0 0.0
    %158 = vmatprep.subr.mxu0 0.0
    %159 = vmatpush1.msra.mxu0 0.0
    %160 = vmatprep.subr.mxu0 0.0
    %161 = vmatpush1.msra.mxu0 0.0
    %162 = vmatprep.subr.mxu0 0.0
    %163 = vmatpush1.msra.mxu0 0.0
    %164 = vmatprep.subr.mxu0 0.0
    %165 = vmatpush1.msra.mxu0 0.0
    %166 = vmatprep.subr.mxu0 0.0
    %167 = vmatpush1.msra.mxu0 0.0
    %168 = vmatprep.subr.mxu0 0.0
    %169 = vmatpush1.msra.mxu0 0.0
    %170 = vmatprep.subr.mxu0 0.0
    %171 = vmatpush1.msra.mxu0 0.0
    %172 = vmatprep.subr.mxu0 0.0
    %173 = vmatpush1.msra.mxu0 0.0
    %174 = vmatprep.subr.mxu0 0.0
    %175 = vmatpush1.msra.mxu0 0.0
    %176 = vmatprep.subr.mxu0 0.0
    %177 = vmatpush1.msra.mxu0 0.0
    %178 = vmatprep.subr.mxu0 0.0
    %179 = vmatpush1.msra.mxu0 0.0
    %180 = vmatprep.subr.mxu0 0.0
    %181 = vmatpush1.msra.mxu0 0.0
    %182 = vmatprep.subr.mxu0 0.0
    %183 = vmatpush1.msra.mxu0 0.0
    %184 = vmatprep.subr.mxu0 0.0
    %185 = vmatpush1.msra.mxu0 0.0
    %186 = vmatprep.subr.mxu0 0.0
    %187 = vmatpush1.msra.mxu0 0.0
    %188 = vmatprep.subr.mxu0 0.0
    %189 = vmatpush1.msra.mxu0 0.0
    %190 = vmatprep.subr.mxu0 0.0
    %191 = vmatpush1.msra.mxu0 0.0
    %192 = vmatprep.subr.mxu0 0.0
    %193 = vmatpush1.msra.mxu0 0.0
    %194 = vmatprep.subr.mxu0 0.0
    %195 = vmatpush1.msra.mxu0 0.0
    %196 = vmatprep.subr.mxu0 0.0
    %197 = vmatpush1.msra.mxu0 0.0
    %198 = vmatprep.subr.mxu0 0.0
    %199 = vmatpush1.msra.mxu0 0.0
    %200 = vmatprep.subr.mxu0 0.0
    %201 = vmatpush1.msra.mxu0 0.0
    %202 = vmatprep.subr.mxu0 0.0
    %203 = vmatpush1.msra.mxu0 0.0
    %204 = vmatprep.subr.mxu0 0.0
    %205 = vmatpush1.msra.mxu0 0.0
    %206 = vmatprep.subr.mxu0 0.0
    %207 = vmatpush1.msra.mxu0 0.0
    %208 = vmatprep.subr.mxu0 0.0
    %209 = vmatpush1.msra.mxu0 0.0
    %210 = vmatprep.subr.mxu0 0.0
    %211 = vmatpush1.msra.mxu0 0.0
    %212 = vmatprep.mubr.f32.mxu0 0.0
    %213 = vmatmul.mubr.f32.gmra.mrb[0].mxu0 %v146
    %v214 = vpop.f32.mrb[0].mxu0
    %v215 = vadd.f32 0.0, %v214
    %v216 = vpop.f32.mrb[0].mxu0
    %217 = vdwg.mxu0
    %v218 = vmax.f32 %v215, -10.0
    %v219 = vmin.f32 %v218, 10.0
    %220 = vst.msk [vmem:[#allocation8 + $0x1] sm:$0x1] %vm132, %v219
    %s221 = sadd.s32 %s29, 1
    %s222 = sshra.s32 %s221, 7
    %s223 = sand.u32 %s221, 127
    %s224 = sadd.s32 %s222, %s28
    %s225 = smul.u32 %s224, 128
    %s226 = sshra.s32 %s221, 7
    %s227 = sand.u32 %s221, 127
    %s228 = sadd.s32 %s225, %s227
    %s229 = sld [smem:[#allocation4 + %s228]]
    %s230 = smul.u32 %s229, 32
    %s231 = scalar_lea.vmem [#allocation5], %s230
    %v232 = vld [vmem:[%s231] sm:$0xff]
    %v233 = vld [vmem:[%s231 + $0x8] sm:$0xff]
    %v234 = vld [vmem:[%s231 + $0x10] sm:$0xff]
    %v235 = vld [vmem:[%s231 + $0x18] sm:$0xff]
    %v237 = vsel %vm56, %v131, 0
    %239 = vmatprep.subr.mxu0 0.0
    %240 = vmatpush1.msra.mxu0 %v232
    %241 = vmatprep.subr.mxu0 0.0
    %242 = vmatpush1.msra.mxu0 %v233
    %243 = vmatprep.subr.mxu0 0.0
    %244 = vmatpush1.msra.mxu0 %v234
    %245 = vmatprep.subr.mxu0 0.0
    %246 = vmatpush1.msra.mxu0 %v235
    %247 = vmatprep.subr.mxu0 0.0
    %248 = vmatpush1.msra.mxu0 0.0
    %249 = vmatprep.subr.mxu0 0.0
    %250 = vmatpush1.msra.mxu0 0.0
    %251 = vmatprep.subr.mxu0 0.0
    %252 = vmatpush1.msra.mxu0 0.0
    %253 = vmatprep.subr.mxu0 0.0
    %254 = vmatpush1.msra.mxu0 0.0
    %255 = vmatprep.subr.mxu0 0.0
    %256 = vmatpush1.msra.mxu0 0.0
    %257 = vmatprep.subr.mxu0 0.0
    %258 = vmatpush1.msra.mxu0 0.0
    %259 = vmatprep.subr.mxu0 0.0
    %260 = vmatpush1.msra.mxu0 0.0
    %261 = vmatprep.subr.mxu0 0.0
    %262 = vmatpush1.msra.mxu0 0.0
    %263 = vmatprep.subr.mxu0 0.0
    %264 = vmatpush1.msra.mxu0 0.0
    %265 = vmatprep.subr.mxu0 0.0
    %266 = vmatpush1.msra.mxu0 0.0
    %267 = vmatprep.subr.mxu0 0.0
    %268 = vmatpush1.msra.mxu0 0.0
    %269 = vmatprep.subr.mxu0 0.0
    %270 = vmatpush1.msra.mxu0 0.0
    %271 = vmatprep.subr.mxu0 0.0
    %272 = vmatpush1.msra.mxu0 0.0
    %273 = vmatprep.subr.mxu0 0.0
    %274 = vmatpush1.msra.mxu0 0.0
    %275 = vmatprep.subr.mxu0 0.0
    %276 = vmatpush1.msra.mxu0 0.0
    %277 = vmatprep.subr.mxu0 0.0
    %278 = vmatpush1.msra.mxu0 0.0
    %279 = vmatprep.subr.mxu0 0.0
    %280 = vmatpush1.msra.mxu0 0.0
    %281 = vmatprep.subr.mxu0 0.0
    %282 = vmatpush1.msra.mxu0 0.0
    %283 = vmatprep.subr.mxu0 0.0
    %284 = vmatpush1.msra.mxu0 0.0
    %285 = vmatprep.subr.mxu0 0.0
    %286 = vmatpush1.msra.mxu0 0.0
    %287 = vmatprep.subr.mxu0 0.0
    %288 = vmatpush1.msra.mxu0 0.0
    %289 = vmatprep.subr.mxu0 0.0
    %290 = vmatpush1.msra.mxu0 0.0
    %291 = vmatprep.subr.mxu0 0.0
    %292 = vmatpush1.msra.mxu0 0.0
    %293 = vmatprep.subr.mxu0 0.0
    %294 = vmatpush1.msra.mxu0 0.0
    %295 = vmatprep.subr.mxu0 0.0
    %296 = vmatpush1.msra.mxu0 0.0
    %297 = vmatprep.subr.mxu0 0.0
    %298 = vmatpush1.msra.mxu0 0.0
    %299 = vmatprep.subr.mxu0 0.0
    %300 = vmatpush1.msra.mxu0 0.0
    %301 = vmatprep.subr.mxu0 0.0
    %302 = vmatpush1.msra.mxu0 0.0
    %303 = vmatprep.mubr.f32.mxu0 0.0
    %304 = vmatmul.mubr.f32.gmra.mrb[0].mxu0 %v237
    %v305 = vpop.f32.mrb[0].mxu0
    %v306 = vadd.f32 0.0, %v305
    %v307 = vpop.f32.mrb[0].mxu0
    %308 = vdwg.mxu0
    %v309 = vmax.f32 %v306, -10.0
    %v310 = vmin.f32 %v309, 10.0
    %v313 = vunpack.c.l.s4 1983009808
    %v314 = vunpack.c.0.s8 %v313
    %v315 = vlaneseq
    %v316 = vshrl.u32 %v315, 7
    %v317 = vsub.s32 %v314, %v316
    %v318 = vrot.slane %v310, %v317
    %319 = vrot.lane.b32.xlu0 %v318, 32
    %v320 = vpop.permute.xlu0 %319
    %vm322 = vcmask 516352
    %323 = vst.msk [vmem:[#allocation8] sm:$0x1] %vm322, %v320
    %s324 = sadd.s32 %s222, %s134
    %s325 = smul.u32 %s324, 128
    %s326 = sadd.s32 %s325, %s227
    %s327 = sld [smem:[#allocation4 + %s326]]
    %s328 = smul.u32 %s327, 32
    %s329 = scalar_lea.vmem [#allocation5], %s328
    %v330 = vld [vmem:[%s329] sm:$0xff]
    %v331 = vld [vmem:[%s329 + $0x8] sm:$0xff]
    %v332 = vld [vmem:[%s329 + $0x10] sm:$0xff]
    %v333 = vld [vmem:[%s329 + $0x18] sm:$0xff]
    %v335 = vsel %vm56, %v219, 0
    %337 = vmatprep.subr.mxu0 0.0
    %338 = vmatpush1.msra.mxu0 %v330
    %339 = vmatprep.subr.mxu0 0.0
    %340 = vmatpush1.msra.mxu0 %v331
    %341 = vmatprep.subr.mxu0 0.0
    %342 = vmatpush1.msra.mxu0 %v332
    %343 = vmatprep.subr.mxu0 0.0
    %344 = vmatpush1.msra.mxu0 %v333
    %345 = vmatprep.subr.mxu0 0.0
    %346 = vmatpush1.msra.mxu0 0.0
    %347 = vmatprep.subr.mxu0 0.0
    %348 = vmatpush1.msra.mxu0 0.0
    %349 = vmatprep.subr.mxu0 0.0
    %350 = vmatpush1.msra.mxu0 0.0
    %351 = vmatprep.subr.mxu0 0.0
    %352 = vmatpush1.msra.mxu0 0.0
    %353 = vmatprep.subr.mxu0 0.0
    %354 = vmatpush1.msra.mxu0 0.0
    %355 = vmatprep.subr.mxu0 0.0
    %356 = vmatpush1.msra.mxu0 0.0
    %357 = vmatprep.subr.mxu0 0.0
    %358 = vmatpush1.msra.mxu0 0.0
    %359 = vmatprep.subr.mxu0 0.0
    %360 = vmatpush1.msra.mxu0 0.0
    %361 = vmatprep.subr.mxu0 0.0
    %362 = vmatpush1.msra.mxu0 0.0
    %363 = vmatprep.subr.mxu0 0.0
    %364 = vmatpush1.msra.mxu0 0.0
    %365 = vmatprep.subr.mxu0 0.0
    %366 = vmatpush1.msra.mxu0 0.0
    %367 = vmatprep.subr.mxu0 0.0
    %368 = vmatpush1.msra.mxu0 0.0
    %369 = vmatprep.subr.mxu0 0.0
    %370 = vmatpush1.msra.mxu0 0.0
    %371 = vmatprep.subr.mxu0 0.0
    %372 = vmatpush1.msra.mxu0 0.0
    %373 = vmatprep.subr.mxu0 0.0
    %374 = vmatpush1.msra.mxu0 0.0
    %375 = vmatprep.subr.mxu0 0.0
    %376 = vmatpush1.msra.mxu0 0.0
    %377 = vmatprep.subr.mxu0 0.0
    %378 = vmatpush1.msra.mxu0 0.0
    %379 = vmatprep.subr.mxu0 0.0
    %380 = vmatpush1.msra.mxu0 0.0
    %381 = vmatprep.subr.mxu0 0.0
    %382 = vmatpush1.msra.mxu0 0.0
    %383 = vmatprep.subr.mxu0 0.0
    %384 = vmatpush1.msra.mxu0 0.0
    %385 = vmatprep.subr.mxu0 0.0
    %386 = vmatpush1.msra.mxu0 0.0
    %387 = vmatprep.subr.mxu0 0.0
    %388 = vmatpush1.msra.mxu0 0.0
    %389 = vmatprep.subr.mxu0 0.0
    %390 = vmatpush1.msra.mxu0 0.0
    %391 = vmatprep.subr.mxu0 0.0
    %392 = vmatpush1.msra.mxu0 0.0
    %393 = vmatprep.subr.mxu0 0.0
    %394 = vmatpush1.msra.mxu0 0.0
    %395 = vmatprep.subr.mxu0 0.0
    %396 = vmatpush1.msra.mxu0 0.0
    %397 = vmatprep.subr.mxu0 0.0
    %398 = vmatpush1.msra.mxu0 0.0
    %399 = vmatprep.subr.mxu0 0.0
    %400 = vmatpush1.msra.mxu0 0.0
    %401 = vmatprep.mubr.f32.mxu0 0.0
    %402 = vmatmul.mubr.f32.gmra.mrb[0].mxu0 %v335
    %v403 = vpop.f32.mrb[0].mxu0
    %v404 = vadd.f32 0.0, %v403
    %v405 = vpop.f32.mrb[0].mxu0
    %406 = vdwg.mxu0
    %v407 = vmax.f32 %v404, -10.0
    %v408 = vmin.f32 %v407, 10.0
    %v411 = vunpack.c.l.s4 1983009808
    %v412 = vunpack.c.0.s8 %v411
    %v413 = vlaneseq
    %v414 = vshrl.u32 %v413, 7
    %v415 = vsub.s32 %v412, %v414
    %v416 = vrot.slane %v408, %v415
    %417 = vrot.lane.b32.xlu0 %v416, 32
    %v418 = vpop.permute.xlu0 %417
    %420 = vst.msk [vmem:[#allocation8 + $0x1] sm:$0x1] %vm322, %v418
    %s421 = sadd.s32 %s29, 2
    %s422 = sshra.s32 %s421, 7
    %s423 = sand.u32 %s421, 127
    %s424 = sadd.s32 %s422, %s28
    %s425 = smul.u32 %s424, 128
    %s426 = sshra.s32 %s421, 7
    %s427 = sand.u32 %s421, 127
    %s428 = sadd.s32 %s425, %s427
    %s429 = sld [smem:[#allocation4 + %s428]]
    %s430 = smul.u32 %s429, 32
    %s431 = scalar_lea.vmem [#allocation5], %s430
    %v432 = vld [vmem:[%s431] sm:$0xff]
    %v433 = vld [vmem:[%s431 + $0x8] sm:$0xff]
    %v434 = vld [vmem:[%s431 + $0x10] sm:$0xff]
    %v435 = vld [vmem:[%s431 + $0x18] sm:$0xff]
    %v436 = vsel %vm56, %v310, 0
    %438 = vmatprep.subr.mxu0 0.0
    %439 = vmatpush1.msra.mxu0 %v432
    %440 = vmatprep.subr.mxu0 0.0
    %441 = vmatpush1.msra.mxu0 %v433
    %442 = vmatprep.subr.mxu0 0.0
    %443 = vmatpush1.msra.mxu0 %v434
    %444 = vmatprep.subr.mxu0 0.0
    %445 = vmatpush1.msra.mxu0 %v435
    %446 = vmatprep.subr.mxu0 0.0
    %447 = vmatpush1.msra.mxu0 0.0
    %448 = vmatprep.subr.mxu0 0.0
    %449 = vmatpush1.msra.mxu0 0.0
    %450 = vmatprep.subr.mxu0 0.0
    %451 = vmatpush1.msra.mxu0 0.0
    %452 = vmatprep.subr.mxu0 0.0
    %453 = vmatpush1.msra.mxu0 0.0
    %454 = vmatprep.subr.mxu0 0.0
    %455 = vmatpush1.msra.mxu0 0.0
    %456 = vmatprep.subr.mxu0 0.0
    %457 = vmatpush1.msra.mxu0 0.0
    %458 = vmatprep.subr.mxu0 0.0
    %459 = vmatpush1.msra.mxu0 0.0
    %460 = vmatprep.subr.mxu0 0.0
    %461 = vmatpush1.msra.mxu0 0.0
    %462 = vmatprep.subr.mxu0 0.0
    %463 = vmatpush1.msra.mxu0 0.0
    %464 = vmatprep.subr.mxu0 0.0
    %465 = vmatpush1.msra.mxu0 0.0
    %466 = vmatprep.subr.mxu0 0.0
    %467 = vmatpush1.msra.mxu0 0.0
    %468 = vmatprep.subr.mxu0 0.0
    %469 = vmatpush1.msra.mxu0 0.0
    %470 = vmatprep.subr.mxu0 0.0
    %471 = vmatpush1.msra.mxu0 0.0
    %472 = vmatprep.subr.mxu0 0.0
    %473 = vmatpush1.msra.mxu0 0.0
    %474 = vmatprep.subr.mxu0 0.0
    %475 = vmatpush1.msra.mxu0 0.0
    %476 = vmatprep.subr.mxu0 0.0
    %477 = vmatpush1.msra.mxu0 0.0
    %478 = vmatprep.subr.mxu0 0.0
    %479 = vmatpush1.msra.mxu0 0.0
    %480 = vmatprep.subr.mxu0 0.0
    %481 = vmatpush1.msra.mxu0 0.0
    %482 = vmatprep.subr.mxu0 0.0
    %483 = vmatpush1.msra.mxu0 0.0
    %484 = vmatprep.subr.mxu0 0.0
    %485 = vmatpush1.msra.mxu0 0.0
    %486 = vmatprep.subr.mxu0 0.0
    %487 = vmatpush1.msra.mxu0 0.0
    %488 = vmatprep.subr.mxu0 0.0
    %489 = vmatpush1.msra.mxu0 0.0
    %490 = vmatprep.subr.mxu0 0.0
    %491 = vmatpush1.msra.mxu0 0.0
    %492 = vmatprep.subr.mxu0 0.0
    %493 = vmatpush1.msra.mxu0 0.0
    %494 = vmatprep.subr.mxu0 0.0
    %495 = vmatpush1.msra.mxu0 0.0
    %496 = vmatprep.subr.mxu0 0.0
    %497 = vmatpush1.msra.mxu0 0.0
    %498 = vmatprep.subr.mxu0 0.0
    %499 = vmatpush1.msra.mxu0 0.0
    %500 = vmatprep.subr.mxu0 0.0
    %501 = vmatpush1.msra.mxu0 0.0
    %502 = vmatprep.mubr.f32.mxu0 0.0
    %503 = vmatmul.mubr.f32.gmra.mrb[0].mxu0 %v436
    %v504 = vpop.f32.mrb[0].mxu0
    %v505 = vadd.f32 0.0, %v504
    %v506 = vpop.f32.mrb[0].mxu0
    %507 = vdwg.mxu0
    %v508 = vmax.f32 %v505, -10.0
    %v509 = vmin.f32 %v508, 10.0
    %v512 = vunpack.c.l.s4 1983009808
    %v513 = vunpack.c.0.s8 %v512
    %v514 = vlaneseq
    %v515 = vshrl.u32 %v514, 7
    %v516 = vsub.s32 %v513, %v515
    %v517 = vrot.slane %v509, %v516
    %518 = vrot.lane.b32.xlu0 %v517, 64
    %v519 = vpop.permute.xlu0 %518
    %vm521 = vcmask 778752
    %522 = vst.msk [vmem:[#allocation8] sm:$0x1] %vm521, %v519
    %s523 = sadd.s32 %s422, %s134
    %s524 = smul.u32 %s523, 128
    %s525 = sadd.s32 %s524, %s427
    %s526 = sld [smem:[#allocation4 + %s525]]
    %s527 = smul.u32 %s526, 32
    %s528 = scalar_lea.vmem [#allocation5], %s527
    %v529 = vld [vmem:[%s528] sm:$0xff]
    %v530 = vld [vmem:[%s528 + $0x8] sm:$0xff]
    %v531 = vld [vmem:[%s528 + $0x10] sm:$0xff]
    %v532 = vld [vmem:[%s528 + $0x18] sm:$0xff]
    %v533 = vsel %vm56, %v408, 0
    %535 = vmatprep.subr.mxu0 0.0
    %536 = vmatpush1.msra.mxu0 %v529
    %537 = vmatprep.subr.mxu0 0.0
    %538 = vmatpush1.msra.mxu0 %v530
    %539 = vmatprep.subr.mxu0 0.0
    %540 = vmatpush1.msra.mxu0 %v531
    %541 = vmatprep.subr.mxu0 0.0
    %542 = vmatpush1.msra.mxu0 %v532
    %543 = vmatprep.subr.mxu0 0.0
    %544 = vmatpush1.msra.mxu0 0.0
    %545 = vmatprep.subr.mxu0 0.0
    %546 = vmatpush1.msra.mxu0 0.0
    %547 = vmatprep.subr.mxu0 0.0
    %548 = vmatpush1.msra.mxu0 0.0
    %549 = vmatprep.subr.mxu0 0.0
    %550 = vmatpush1.msra.mxu0 0.0
    %551 = vmatprep.subr.mxu0 0.0
    %552 = vmatpush1.msra.mxu0 0.0
    %553 = vmatprep.subr.mxu0 0.0
    %554 = vmatpush1.msra.mxu0 0.0
    %555 = vmatprep.subr.mxu0 0.0
    %556 = vmatpush1.msra.mxu0 0.0
    %557 = vmatprep.subr.mxu0 0.0
    %558 = vmatpush1.msra.mxu0 0.0
    %559 = vmatprep.subr.mxu0 0.0
    %560 = vmatpush1.msra.mxu0 0.0
    %561 = vmatprep.subr.mxu0 0.0
    %562 = vmatpush1.msra.mxu0 0.0
    %563 = vmatprep.subr.mxu0 0.0
    %564 = vmatpush1.msra.mxu0 0.0
    %565 = vmatprep.subr.mxu0 0.0
    %566 = vmatpush1.msra.mxu0 0.0
    %567 = vmatprep.subr.mxu0 0.0
    %568 = vmatpush1.msra.mxu0 0.0
    %569 = vmatprep.subr.mxu0 0.0
    %570 = vmatpush1.msra.mxu0 0.0
    %571 = vmatprep.subr.mxu0 0.0
    %572 = vmatpush1.msra.mxu0 0.0
    %573 = vmatprep.subr.mxu0 0.0
    %574 = vmatpush1.msra.mxu0 0.0
    %575 = vmatprep.subr.mxu0 0.0
    %576 = vmatpush1.msra.mxu0 0.0
    %577 = vmatprep.subr.mxu0 0.0
    %578 = vmatpush1.msra.mxu0 0.0
    %579 = vmatprep.subr.mxu0 0.0
    %580 = vmatpush1.msra.mxu0 0.0
    %581 = vmatprep.subr.mxu0 0.0
    %582 = vmatpush1.msra.mxu0 0.0
    %583 = vmatprep.subr.mxu0 0.0
    %584 = vmatpush1.msra.mxu0 0.0
    %585 = vmatprep.subr.mxu0 0.0
    %586 = vmatpush1.msra.mxu0 0.0
    %587 = vmatprep.subr.mxu0 0.0
    %588 = vmatpush1.msra.mxu0 0.0
    %589 = vmatprep.subr.mxu0 0.0
    %590 = vmatpush1.msra.mxu0 0.0
    %591 = vmatprep.subr.mxu0 0.0
    %592 = vmatpush1.msra.mxu0 0.0
    %593 = vmatprep.subr.mxu0 0.0
    %594 = vmatpush1.msra.mxu0 0.0
    %595 = vmatprep.subr.mxu0 0.0
    %596 = vmatpush1.msra.mxu0 0.0
    %597 = vmatprep.subr.mxu0 0.0
    %598 = vmatpush1.msra.mxu0 0.0
    %599 = vmatprep.mubr.f32.mxu0 0.0
    %600 = vmatmul.mubr.f32.gmra.mrb[0].mxu0 %v533
    %v601 = vpop.f32.mrb[0].mxu0
    %v602 = vadd.f32 0.0, %v601
    %v603 = vpop.f32.mrb[0].mxu0
    %604 = vdwg.mxu0
    %v605 = vmax.f32 %v602, -10.0
    %v606 = vmin.f32 %v605, 10.0
    %v609 = vunpack.c.l.s4 1983009808
    %v610 = vunpack.c.0.s8 %v609
    %v611 = vlaneseq
    %v612 = vshrl.u32 %v611, 7
    %v613 = vsub.s32 %v610, %v612
    %v614 = vrot.slane %v606, %v613
    %615 = vrot.lane.b32.xlu0 %v614, 64
    %v616 = vpop.permute.xlu0 %615
    %618 = vst.msk [vmem:[#allocation8 + $0x1] sm:$0x1] %vm521, %v616
    %s619 = sadd.s32 %s29, 3
    %s620 = sshra.s32 %s619, 7
    %s621 = sand.u32 %s619, 127
    %s622 = sadd.s32 %s620, %s28
    %s623 = smul.u32 %s622, 128
    %s624 = sshra.s32 %s619, 7
    %s625 = sand.u32 %s619, 127
    %s626 = sadd.s32 %s623, %s625
    %s627 = sld [smem:[#allocation4 + %s626]]
    %s628 = smul.u32 %s627, 32
    %s629 = scalar_lea.vmem [#allocation5], %s628
    %v630 = vld [vmem:[%s629] sm:$0xff]
    %v631 = vld [vmem:[%s629 + $0x8] sm:$0xff]
    %v632 = vld [vmem:[%s629 + $0x10] sm:$0xff]
    %v633 = vld [vmem:[%s629 + $0x18] sm:$0xff]
    %v634 = vsel %vm56, %v509, 0
    %636 = vmatprep.subr.mxu0 0.0
    %637 = vmatpush1.msra.mxu0 %v630
    %638 = vmatprep.subr.mxu0 0.0
    %639 = vmatpush1.msra.mxu0 %v631
    %640 = vmatprep.subr.mxu0 0.0
    %641 = vmatpush1.msra.mxu0 %v632
    %642 = vmatprep.subr.mxu0 0.0
    %643 = vmatpush1.msra.mxu0 %v633
    %644 = vmatprep.subr.mxu0 0.0
    %645 = vmatpush1.msra.mxu0 0.0
    %646 = vmatprep.subr.mxu0 0.0
    %647 = vmatpush1.msra.mxu0 0.0
    %648 = vmatprep.subr.mxu0 0.0
    %649 = vmatpush1.msra.mxu0 0.0
    %650 = vmatprep.subr.mxu0 0.0
    %651 = vmatpush1.msra.mxu0 0.0
    %652 = vmatprep.subr.mxu0 0.0
    %653 = vmatpush1.msra.mxu0 0.0
    %654 = vmatprep.subr.mxu0 0.0
    %655 = vmatpush1.msra.mxu0 0.0
    %656 = vmatprep.subr.mxu0 0.0
    %657 = vmatpush1.msra.mxu0 0.0
    %658 = vmatprep.subr.mxu0 0.0
    %659 = vmatpush1.msra.mxu0 0.0
    %660 = vmatprep.subr.mxu0 0.0
    %661 = vmatpush1.msra.mxu0 0.0
    %662 = vmatprep.subr.mxu0 0.0
    %663 = vmatpush1.msra.mxu0 0.0
    %664 = vmatprep.subr.mxu0 0.0
    %665 = vmatpush1.msra.mxu0 0.0
    %666 = vmatprep.subr.mxu0 0.0
    %667 = vmatpush1.msra.mxu0 0.0
    %668 = vmatprep.subr.mxu0 0.0
    %669 = vmatpush1.msra.mxu0 0.0
    %670 = vmatprep.subr.mxu0 0.0
    %671 = vmatpush1.msra.mxu0 0.0
    %672 = vmatprep.subr.mxu0 0.0
    %673 = vmatpush1.msra.mxu0 0.0
    %674 = vmatprep.subr.mxu0 0.0
    %675 = vmatpush1.msra.mxu0 0.0
    %676 = vmatprep.subr.mxu0 0.0
    %677 = vmatpush1.msra.mxu0 0.0
    %678 = vmatprep.subr.mxu0 0.0
    %679 = vmatpush1.msra.mxu0 0.0
    %680 = vmatprep.subr.mxu0 0.0
    %681 = vmatpush1.msra.mxu0 0.0
    %682 = vmatprep.subr.mxu0 0.0
    %683 = vmatpush1.msra.mxu0 0.0
    %684 = vmatprep.subr.mxu0 0.0
    %685 = vmatpush1.msra.mxu0 0.0
    %686 = vmatprep.subr.mxu0 0.0
    %687 = vmatpush1.msra.mxu0 0.0
    %688 = vmatprep.subr.mxu0 0.0
    %689 = vmatpush1.msra.mxu0 0.0
    %690 = vmatprep.subr.mxu0 0.0
    %691 = vmatpush1.msra.mxu0 0.0
    %692 = vmatprep.subr.mxu0 0.0
    %693 = vmatpush1.msra.mxu0 0.0
    %694 = vmatprep.subr.mxu0 0.0
    %695 = vmatpush1.msra.mxu0 0.0
    %696 = vmatprep.subr.mxu0 0.0
    %697 = vmatpush1.msra.mxu0 0.0
    %698 = vmatprep.subr.mxu0 0.0
    %699 = vmatpush1.msra.mxu0 0.0
    %700 = vmatprep.mubr.f32.mxu0 0.0
    %701 = vmatmul.mubr.f32.gmra.mrb[0].mxu0 %v634
    %v702 = vpop.f32.mrb[0].mxu0
    %v703 = vadd.f32 0.0, %v702
    %v704 = vpop.f32.mrb[0].mxu0
    %705 = vdwg.mxu0
    %v706 = vmax.f32 %v703, -10.0
    %v707 = vmin.f32 %v706, 10.0
    %v710 = vunpack.c.l.s4 1983009808
    %v711 = vunpack.c.0.s8 %v710
    %v712 = vlaneseq
    %v713 = vshrl.u32 %v712, 7
    %v714 = vsub.s32 %v711, %v713
    %v715 = vrot.slane %v707, %v714
    %716 = vrot.lane.b32.xlu0 %v715, 96
    %v717 = vpop.permute.xlu0 %716
    %vm719 = vcmask 1041152
    %720 = vst.msk [vmem:[#allocation8] sm:$0x1] %vm719, %v717
    %s721 = sadd.s32 %s620, %s134
    %s722 = smul.u32 %s721, 128
    %s723 = sadd.s32 %s722, %s625
    %s724 = sld [smem:[#allocation4 + %s723]]
    %s725 = smul.u32 %s724, 32
    %s726 = scalar_lea.vmem [#allocation5], %s725
    %v727 = vld [vmem:[%s726] sm:$0xff]
    %v728 = vld [vmem:[%s726 + $0x8] sm:$0xff]
    %v729 = vld [vmem:[%s726 + $0x10] sm:$0xff]
    %v730 = vld [vmem:[%s726 + $0x18] sm:$0xff]
    %v731 = vsel %vm56, %v606, 0
    %733 = vmatprep.subr.mxu0 0.0
    %734 = vmatpush1.msra.mxu0 %v727
    %735 = vmatprep.subr.mxu0 0.0
    %736 = vmatpush1.msra.mxu0 %v728
    %737 = vmatprep.subr.mxu0 0.0
    %738 = vmatpush1.msra.mxu0 %v729
    %739 = vmatprep.subr.mxu0 0.0
    %740 = vmatpush1.msra.mxu0 %v730
    %741 = vmatprep.subr.mxu0 0.0
    %742 = vmatpush1.msra.mxu0 0.0
    %743 = vmatprep.subr.mxu0 0.0
    %744 = vmatpush1.msra.mxu0 0.0
    %745 = vmatprep.subr.mxu0 0.0
    %746 = vmatpush1.msra.mxu0 0.0
    %747 = vmatprep.subr.mxu0 0.0
    %748 = vmatpush1.msra.mxu0 0.0
    %749 = vmatprep.subr.mxu0 0.0
    %750 = vmatpush1.msra.mxu0 0.0
    %751 = vmatprep.subr.mxu0 0.0
    %752 = vmatpush1.msra.mxu0 0.0
    %753 = vmatprep.subr.mxu0 0.0
    %754 = vmatpush1.msra.mxu0 0.0
    %755 = vmatprep.subr.mxu0 0.0
    %756 = vmatpush1.msra.mxu0 0.0
    %757 = vmatprep.subr.mxu0 0.0
    %758 = vmatpush1.msra.mxu0 0.0
    %759 = vmatprep.subr.mxu0 0.0
    %760 = vmatpush1.msra.mxu0 0.0
    %761 = vmatprep.subr.mxu0 0.0
    %762 = vmatpush1.msra.mxu0 0.0
    %763 = vmatprep.subr.mxu0 0.0
    %764 = vmatpush1.msra.mxu0 0.0
    %765 = vmatprep.subr.mxu0 0.0
    %766 = vmatpush1.msra.mxu0 0.0
    %767 = vmatprep.subr.mxu0 0.0
    %768 = vmatpush1.msra.mxu0 0.0
    %769 = vmatprep.subr.mxu0 0.0
    %770 = vmatpush1.msra.mxu0 0.0
    %771 = vmatprep.subr.mxu0 0.0
    %772 = vmatpush1.msra.mxu0 0.0
    %773 = vmatprep.subr.mxu0 0.0
    %774 = vmatpush1.msra.mxu0 0.0
    %775 = vmatprep.subr.mxu0 0.0
    %776 = vmatpush1.msra.mxu0 0.0
    %777 = vmatprep.subr.mxu0 0.0
    %778 = vmatpush1.msra.mxu0 0.0
    %779 = vmatprep.subr.mxu0 0.0
    %780 = vmatpush1.msra.mxu0 0.0
    %781 = vmatprep.subr.mxu0 0.0
    %782 = vmatpush1.msra.mxu0 0.0
    %783 = vmatprep.subr.mxu0 0.0
    %784 = vmatpush1.msra.mxu0 0.0
    %785 = vmatprep.subr.mxu0 0.0
    %786 = vmatpush1.msra.mxu0 0.0
    %787 = vmatprep.subr.mxu0 0.0
    %788 = vmatpush1.msra.mxu0 0.0
    %789 = vmatprep.subr.mxu0 0.0
    %790 = vmatpush1.msra.mxu0 0.0
    %791 = vmatprep.subr.mxu0 0.0
    %792 = vmatpush1.msra.mxu0 0.0
    %793 = vmatprep.subr.mxu0 0.0
    %794 = vmatpush1.msra.mxu0 0.0
    %795 = vmatprep.subr.mxu0 0.0
    %796 = vmatpush1.msra.mxu0 0.0
    %797 = vmatprep.mubr.f32.mxu0 0.0
    %798 = vmatmul.mubr.f32.gmra.mrb[0].mxu0 %v731
    %v799 = vpop.f32.mrb[0].mxu0
    %v800 = vadd.f32 0.0, %v799
    %v801 = vpop.f32.mrb[0].mxu0
    %802 = vdwg.mxu0
    %v803 = vmax.f32 %v800, -10.0
    %v804 = vmin.f32 %v803, 10.0
    %v807 = vunpack.c.l.s4 1983009808
    %v808 = vunpack.c.0.s8 %v807
    %v809 = vlaneseq
    %v810 = vshrl.u32 %v809, 7
    %v811 = vsub.s32 %v808, %v810
    %v812 = vrot.slane %v804, %v811
    %813 = vrot.lane.b32.xlu0 %v812, 96
    %v814 = vpop.permute.xlu0 %813
    %816 = vst.msk [vmem:[#allocation8 + $0x1] sm:$0x1] %vm719, %v814
    %s817 = sadd.s32 %s29, 4
    %s818 = sshra.s32 %s817, 7
    %s819 = sand.u32 %s817, 127
    %s820 = sadd.s32 %s818, %s28
    %s821 = smul.u32 %s820, 128
    %s822 = sshra.s32 %s817, 7
    %s823 = sand.u32 %s817, 127
    %s824 = sadd.s32 %s821, %s823
    %s825 = sld [smem:[#allocation4 + %s824]]
    %s826 = smul.u32 %s825, 32
    %s827 = scalar_lea.vmem [#allocation5], %s826
    %v828 = vld [vmem:[%s827] sm:$0xff]
    %v829 = vld [vmem:[%s827 + $0x8] sm:$0xff]
    %v830 = vld [vmem:[%s827 + $0x10] sm:$0xff]
    %v831 = vld [vmem:[%s827 + $0x18] sm:$0xff]
    %v832 = vsel %vm56, %v707, 0
    %834 = vmatprep.subr.mxu0 0.0
    %835 = vmatpush1.msra.mxu0 %v828
    %836 = vmatprep.subr.mxu0 0.0
    %837 = vmatpush1.msra.mxu0 %v829
    %838 = vmatprep.subr.mxu0 0.0
    %839 = vmatpush1.msra.mxu0 %v830
    %840 = vmatprep.subr.mxu0 0.0
    %841 = vmatpush1.msra.mxu0 %v831
    %842 = vmatprep.subr.mxu0 0.0
    %843 = vmatpush1.msra.mxu0 0.0
    %844 = vmatprep.subr.mxu0 0.0
    %845 = vmatpush1.msra.mxu0 0.0
    %846 = vmatprep.subr.mxu0 0.0
    %847 = vmatpush1.msra.mxu0 0.0
    %848 = vmatprep.subr.mxu0 0.0
    %849 = vmatpush1.msra.mxu0 0.0
    %850 = vmatprep.subr.mxu0 0.0
    %851 = vmatpush1.msra.mxu0 0.0
    %852 = vmatprep.subr.mxu0 0.0
    %853 = vmatpush1.msra.mxu0 0.0
    %854 = vmatprep.subr.mxu0 0.0
    %855 = vmatpush1.msra.mxu0 0.0
    %856 = vmatprep.subr.mxu0 0.0
    %857 = vmatpush1.msra.mxu0 0.0
    %858 = vmatprep.subr.mxu0 0.0
    %859 = vmatpush1.msra.mxu0 0.0
    %860 = vmatprep.subr.mxu0 0.0
    %861 = vmatpush1.msra.mxu0 0.0
    %862 = vmatprep.subr.mxu0 0.0
    %863 = vmatpush1.msra.mxu0 0.0
    %864 = vmatprep.subr.mxu0 0.0
    %865 = vmatpush1.msra.mxu0 0.0
    %866 = vmatprep.subr.mxu0 0.0
    %867 = vmatpush1.msra.mxu0 0.0
    %868 = vmatprep.subr.mxu0 0.0
    %869 = vmatpush1.msra.mxu0 0.0
    %870 = vmatprep.subr.mxu0 0.0
    %871 = vmatpush1.msra.mxu0 0.0
    %872 = vmatprep.subr.mxu0 0.0
    %873 = vmatpush1.msra.mxu0 0.0
    %874 = vmatprep.subr.mxu0 0.0
    %875 = vmatpush1.msra.mxu0 0.0
    %876 = vmatprep.subr.mxu0 0.0
    %877 = vmatpush1.msra.mxu0 0.0
    %878 = vmatprep.subr.mxu0 0.0
    %879 = vmatpush1.msra.mxu0 0.0
    %880 = vmatprep.subr.mxu0 0.0
    %881 = vmatpush1.msra.mxu0 0.0
    %882 = vmatprep.subr.mxu0 0.0
    %883 = vmatpush1.msra.mxu0 0.0
    %884 = vmatprep.subr.mxu0 0.0
    %885 = vmatpush1.msra.mxu0 0.0
    %886 = vmatprep.subr.mxu0 0.0
    %887 = vmatpush1.msra.mxu0 0.0
    %888 = vmatprep.subr.mxu0 0.0
    %889 = vmatpush1.msra.mxu0 0.0
    %890 = vmatprep.subr.mxu0 0.0
    %891 = vmatpush1.msra.mxu0 0.0
    %892 = vmatprep.subr.mxu0 0.0
    %893 = vmatpush1.msra.mxu0 0.0
    %894 = vmatprep.subr.mxu0 0.0
    %895 = vmatpush1.msra.mxu0 0.0
    %896 = vmatprep.subr.mxu0 0.0
    %897 = vmatpush1.msra.mxu0 0.0
    %898 = vmatprep.mubr.f32.mxu0 0.0
    %899 = vmatmul.mubr.f32.gmra.mrb[0].mxu0 %v832
    %v900 = vpop.f32.mrb[0].mxu0
    %v901 = vadd.f32 0.0, %v900
    %v902 = vpop.f32.mrb[0].mxu0
    %903 = vdwg.mxu0
    %v904 = vmax.f32 %v901, -10.0
    %v905 = vmin.f32 %v904, 10.0
    %906 = vst.msk [vmem:[#allocation8 + $0x2] sm:$0x1] %vm132, %v905
    %s907 = sadd.s32 %s818, %s134
    %s908 = smul.u32 %s907, 128
    %s909 = sadd.s32 %s908, %s823
    %s910 = sld [smem:[#allocation4 + %s909]]
    %s911 = smul.u32 %s910, 32
    %s912 = scalar_lea.vmem [#allocation5], %s911
    %v913 = vld [vmem:[%s912] sm:$0xff]
    %v914 = vld [vmem:[%s912 + $0x8] sm:$0xff]
    %v915 = vld [vmem:[%s912 + $0x10] sm:$0xff]
    %v916 = vld [vmem:[%s912 + $0x18] sm:$0xff]
    %v917 = vsel %vm56, %v804, 0
    %919 = vmatprep.subr.mxu0 0.0
    %920 = vmatpush1.msra.mxu0 %v913
    %921 = vmatprep.subr.mxu0 0.0
    %922 = vmatpush1.msra.mxu0 %v914
    %923 = vmatprep.subr.mxu0 0.0
    %924 = vmatpush1.msra.mxu0 %v915
    %925 = vmatprep.subr.mxu0 0.0
    %926 = vmatpush1.msra.mxu0 %v916
    %927 = vmatprep.subr.mxu0 0.0
    %928 = vmatpush1.msra.mxu0 0.0
    %929 = vmatprep.subr.mxu0 0.0
    %930 = vmatpush1.msra.mxu0 0.0
    %931 = vmatprep.subr.mxu0 0.0
    %932 = vmatpush1.msra.mxu0 0.0
    %933 = vmatprep.subr.mxu0 0.0
    %934 = vmatpush1.msra.mxu0 0.0
    %935 = vmatprep.subr.mxu0 0.0
    %936 = vmatpush1.msra.mxu0 0.0
    %937 = vmatprep.subr.mxu0 0.0
    %938 = vmatpush1.msra.mxu0 0.0
    %939 = vmatprep.subr.mxu0 0.0
    %940 = vmatpush1.msra.mxu0 0.0
    %941 = vmatprep.subr.mxu0 0.0
    %942 = vmatpush1.msra.mxu0 0.0
    %943 = vmatprep.subr.mxu0 0.0
    %944 = vmatpush1.msra.mxu0 0.0
    %945 = vmatprep.subr.mxu0 0.0
    %946 = vmatpush1.msra.mxu0 0.0
    %947 = vmatprep.subr.mxu0 0.0
    %948 = vmatpush1.msra.mxu0 0.0
    %949 = vmatprep.subr.mxu0 0.0
    %950 = vmatpush1.msra.mxu0 0.0
    %951 = vmatprep.subr.mxu0 0.0
    %952 = vmatpush1.msra.mxu0 0.0
    %953 = vmatprep.subr.mxu0 0.0
    %954 = vmatpush1.msra.mxu0 0.0
    %955 = vmatprep.subr.mxu0 0.0
    %956 = vmatpush1.msra.mxu0 0.0
    %957 = vmatprep.subr.mxu0 0.0
    %958 = vmatpush1.msra.mxu0 0.0
    %959 = vmatprep.subr.mxu0 0.0
    %960 = vmatpush1.msra.mxu0 0.0
    %961 = vmatprep.subr.mxu0 0.0
    %962 = vmatpush1.msra.mxu0 0.0
    %963 = vmatprep.subr.mxu0 0.0
    %964 = vmatpush1.msra.mxu0 0.0
    %965 = vmatprep.subr.mxu0 0.0
    %966 = vmatpush1.msra.mxu0 0.0
    %967 = vmatprep.subr.mxu0 0.0
    %968 = vmatpush1.msra.mxu0 0.0
    %969 = vmatprep.subr.mxu0 0.0
    %970 = vmatpush1.msra.mxu0 0.0
    %971 = vmatprep.subr.mxu0 0.0
    %972 = vmatpush1.msra.mxu0 0.0
    %973 = vmatprep.subr.mxu0 0.0
    %974 = vmatpush1.msra.mxu0 0.0
    %975 = vmatprep.subr.mxu0 0.0
    %976 = vmatpush1.msra.mxu0 0.0
    %977 = vmatprep.subr.mxu0 0.0
    %978 = vmatpush1.msra.mxu0 0.0
    %979 = vmatprep.subr.mxu0 0.0
    %980 = vmatpush1.msra.mxu0 0.0
    %981 = vmatprep.subr.mxu0 0.0
    %982 = vmatpush1.msra.mxu0 0.0
    %983 = vmatprep.mubr.f32.mxu0 0.0
    %984 = vmatmul.mubr.f32.gmra.mrb[0].mxu0 %v917
    %v985 = vpop.f32.mrb[0].mxu0
    %v986 = vadd.f32 0.0, %v985
    %v987 = vpop.f32.mrb[0].mxu0
    %988 = vdwg.mxu0
    %v989 = vmax.f32 %v986, -10.0
    %v990 = vmin.f32 %v989, 10.0
    %991 = vst.msk [vmem:[#allocation8 + $0x3] sm:$0x1] %vm132, %v990
    %s992 = sadd.s32 %s29, 5
    %s993 = sshra.s32 %s992, 7
    %s994 = sand.u32 %s992, 127
    %s995 = sadd.s32 %s993, %s28
    %s996 = smul.u32 %s995, 128
    %s997 = sshra.s32 %s992, 7
    %s998 = sand.u32 %s992, 127
    %s999 = sadd.s32 %s996, %s998
    %s1000 = sld [smem:[#allocation4 + %s999]]
    %s1001 = smul.u32 %s1000, 32
    %s1002 = scalar_lea.vmem [#allocation5], %s1001
    %v1003 = vld [vmem:[%s1002] sm:$0xff]
    %v1004 = vld [vmem:[%s1002 + $0x8] sm:$0xff]
    %v1005 = vld [vmem:[%s1002 + $0x10] sm:$0xff]
    %v1006 = vld [vmem:[%s1002 + $0x18] sm:$0xff]
    %v1008 = vsel %vm56, %v905, 0
    %1010 = vmatprep.subr.mxu0 0.0
    %1011 = vmatpush1.msra.mxu0 %v1003
    %1012 = vmatprep.subr.mxu0 0.0
    %1013 = vmatpush1.msra.mxu0 %v1004
    %1014 = vmatprep.subr.mxu0 0.0
    %1015 = vmatpush1.msra.mxu0 %v1005
    %1016 = vmatprep.subr.mxu0 0.0
    %1017 = vmatpush1.msra.mxu0 %v1006
    %1018 = vmatprep.subr.mxu0 0.0
    %1019 = vmatpush1.msra.mxu0 0.0
    %1020 = vmatprep.subr.mxu0 0.0
    %1021 = vmatpush1.msra.mxu0 0.0
    %1022 = vmatprep.subr.mxu0 0.0
    %1023 = vmatpush1.msra.mxu0 0.0
    %1024 = vmatprep.subr.mxu0 0.0
    %1025 = vmatpush1.msra.mxu0 0.0
    %1026 = vmatprep.subr.mxu0 0.0
    %1027 = vmatpush1.msra.mxu0 0.0
    %1028 = vmatprep.subr.mxu0 0.0
    %1029 = vmatpush1.msra.mxu0 0.0
    %1030 = vmatprep.subr.mxu0 0.0
    %1031 = vmatpush1.msra.mxu0 0.0
    %1032 = vmatprep.subr.mxu0 0.0
    %1033 = vmatpush1.msra.mxu0 0.0
    %1034 = vmatprep.subr.mxu0 0.0
    %1035 = vmatpush1.msra.mxu0 0.0
    %1036 = vmatprep.subr.mxu0 0.0
    %1037 = vmatpush1.msra.mxu0 0.0
    %1038 = vmatprep.subr.mxu0 0.0
    %1039 = vmatpush1.msra.mxu0 0.0
    %1040 = vmatprep.subr.mxu0 0.0
    %1041 = vmatpush1.msra.mxu0 0.0
    %1042 = vmatprep.subr.mxu0 0.0
    %1043 = vmatpush1.msra.mxu0 0.0
    %1044 = vmatprep.subr.mxu0 0.0
    %1045 = vmatpush1.msra.mxu0 0.0
    %1046 = vmatprep.subr.mxu0 0.0
    %1047 = vmatpush1.msra.mxu0 0.0
    %1048 = vmatprep.subr.mxu0 0.0
    %1049 = vmatpush1.msra.mxu0 0.0
    %1050 = vmatprep.subr.mxu0 0.0
    %1051 = vmatpush1.msra.mxu0 0.0
    %1052 = vmatprep.subr.mxu0 0.0
    %1053 = vmatpush1.msra.mxu0 0.0
    %1054 = vmatprep.subr.mxu0 0.0
    %1055 = vmatpush1.msra.mxu0 0.0
    %1056 = vmatprep.subr.mxu0 0.0
    %1057 = vmatpush1.msra.mxu0 0.0
    %1058 = vmatprep.subr.mxu0 0.0
    %1059 = vmatpush1.msra.mxu0 0.0
    %1060 = vmatprep.subr.mxu0 0.0
    %1061 = vmatpush1.msra.mxu0 0.0
    %1062 = vmatprep.subr.mxu0 0.0
    %1063 = vmatpush1.msra.mxu0 0.0
    %1064 = vmatprep.subr.mxu0 0.0
    %1065 = vmatpush1.msra.mxu0 0.0
    %1066 = vmatprep.subr.mxu0 0.0
    %1067 = vmatpush1.msra.mxu0 0.0
    %1068 = vmatprep.subr.mxu0 0.0
    %1069 = vmatpush1.msra.mxu0 0.0
    %1070 = vmatprep.subr.mxu0 0.0
    %1071 = vmatpush1.msra.mxu0 0.0
    %1072 = vmatprep.subr.mxu0 0.0
    %1073 = vmatpush1.msra.mxu0 0.0
    %1074 = vmatprep.mubr.f32.mxu0 0.0
    %1075 = vmatmul.mubr.f32.gmra.mrb[0].mxu0 %v1008
    %v1076 = vpop.f32.mrb[0].mxu0
    %v1077 = vadd.f32 0.0, %v1076
    %v1078 = vpop.f32.mrb[0].mxu0
    %1079 = vdwg.mxu0
    %v1080 = vmax.f32 %v1077, -10.0
    %v1081 = vmin.f32 %v1080, 10.0
    %v1084 = vunpack.c.l.s4 1983009808
    %v1085 = vunpack.c.0.s8 %v1084
    %v1086 = vlaneseq
    %v1087 = vshrl.u32 %v1086, 7
    %v1088 = vsub.s32 %v1085, %v1087
    %v1089 = vrot.slane %v1081, %v1088
    %1090 = vrot.lane.b32.xlu0 %v1089, 32
    %v1091 = vpop.permute.xlu0 %1090
    %1093 = vst.msk [vmem:[#allocation8 + $0x2] sm:$0x1] %vm322, %v1091
    %s1094 = sadd.s32 %s993, %s134
    %s1095 = smul.u32 %s1094, 128
    %s1096 = sadd.s32 %s1095, %s998
    %s1097 = sld [smem:[#allocation4 + %s1096]]
    %s1098 = smul.u32 %s1097, 32
    %s1099 = scalar_lea.vmem [#allocation5], %s1098
    %v1100 = vld [vmem:[%s1099] sm:$0xff]
    %v1101 = vld [vmem:[%s1099 + $0x8] sm:$0xff]
    %v1102 = vld [vmem:[%s1099 + $0x10] sm:$0xff]
    %v1103 = vld [vmem:[%s1099 + $0x18] sm:$0xff]
    %v1105 = vsel %vm56, %v990, 0
    %1107 = vmatprep.subr.mxu0 0.0
    %1108 = vmatpush1.msra.mxu0 %v1100
    %1109 = vmatprep.subr.mxu0 0.0
    %1110 = vmatpush1.msra.mxu0 %v1101
    %1111 = vmatprep.subr.mxu0 0.0
    %1112 = vmatpush1.msra.mxu0 %v1102
    %1113 = vmatprep.subr.mxu0 0.0
    %1114 = vmatpush1.msra.mxu0 %v1103
    %1115 = vmatprep.subr.mxu0 0.0
    %1116 = vmatpush1.msra.mxu0 0.0
    %1117 = vmatprep.subr.mxu0 0.0
    %1118 = vmatpush1.msra.mxu0 0.0
    %1119 = vmatprep.subr.mxu0 0.0
    %1120 = vmatpush1.msra.mxu0 0.0
    %1121 = vmatprep.subr.mxu0 0.0
    %1122 = vmatpush1.msra.mxu0 0.0
    %1123 = vmatprep.subr.mxu0 0.0
    %1124 = vmatpush1.msra.mxu0 0.0
    %1125 = vmatprep.subr.mxu0 0.0
    %1126 = vmatpush1.msra.mxu0 0.0
    %1127 = vmatprep.subr.mxu0 0.0
    %1128 = vmatpush1.msra.mxu0 0.0
    %1129 = vmatprep.subr.mxu0 0.0
    %1130 = vmatpush1.msra.mxu0 0.0
    %1131 = vmatprep.subr.mxu0 0.0
    %1132 = vmatpush1.msra.mxu0 0.0
    %1133 = vmatprep.subr.mxu0 0.0
    %1134 = vmatpush1.msra.mxu0 0.0
    %1135 = vmatprep.subr.mxu0 0.0
    %1136 = vmatpush1.msra.mxu0 0.0
    %1137 = vmatprep.subr.mxu0 0.0
    %1138 = vmatpush1.msra.mxu0 0.0
    %1139 = vmatprep.subr.mxu0 0.0
    %1140 = vmatpush1.msra.mxu0 0.0
    %1141 = vmatprep.subr.mxu0 0.0
    %1142 = vmatpush1.msra.mxu0 0.0
    %1143 = vmatprep.subr.mxu0 0.0
    %1144 = vmatpush1.msra.mxu0 0.0
    %1145 = vmatprep.subr.mxu0 0.0
    %1146 = vmatpush1.msra.mxu0 0.0
    %1147 = vmatprep.subr.mxu0 0.0
    %1148 = vmatpush1.msra.mxu0 0.0
    %1149 = vmatprep.subr.mxu0 0.0
    %1150 = vmatpush1.msra.mxu0 0.0
    %1151 = vmatprep.subr.mxu0 0.0
    %1152 = vmatpush1.msra.mxu0 0.0
    %1153 = vmatprep.subr.mxu0 0.0
    %1154 = vmatpush1.msra.mxu0 0.0
    %1155 = vmatprep.subr.mxu0 0.0
    %1156 = vmatpush1.msra.mxu0 0.0
    %1157 = vmatprep.subr.mxu0 0.0
    %1158 = vmatpush1.msra.mxu0 0.0
    %1159 = vmatprep.subr.mxu0 0.0
    %1160 = vmatpush1.msra.mxu0 0.0
    %1161 = vmatprep.subr.mxu0 0.0
    %1162 = vmatpush1.msra.mxu0 0.0
    %1163 = vmatprep.subr.mxu0 0.0
    %1164 = vmatpush1.msra.mxu0 0.0
    %1165 = vmatprep.subr.mxu0 0.0
    %1166 = vmatpush1.msra.mxu0 0.0
    %1167 = vmatprep.subr.mxu0 0.0
    %1168 = vmatpush1.msra.mxu0 0.0
    %1169 = vmatprep.subr.mxu0 0.0
    %1170 = vmatpush1.msra.mxu0 0.0
    %1171 = vmatprep.mubr.f32.mxu0 0.0
    %1172 = vmatmul.mubr.f32.gmra.mrb[0].mxu0 %v1105
    %v1173 = vpop.f32.mrb[0].mxu0
    %v1174 = vadd.f32 0.0, %v1173
    %v1175 = vpop.f32.mrb[0].mxu0
    %1176 = vdwg.mxu0
    %v1177 = vmax.f32 %v1174, -10.0
    %v1178 = vmin.f32 %v1177, 10.0
    %v1181 = vunpack.c.l.s4 1983009808
    %v1182 = vunpack.c.0.s8 %v1181
    %v1183 = vlaneseq
    %v1184 = vshrl.u32 %v1183, 7
    %v1185 = vsub.s32 %v1182, %v1184
    %v1186 = vrot.slane %v1178, %v1185
    %1187 = vrot.lane.b32.xlu0 %v1186, 32
    %v1188 = vpop.permute.xlu0 %1187
    %1190 = vst.msk [vmem:[#allocation8 + $0x3] sm:$0x1] %vm322, %v1188
    %s1191 = sadd.s32 %s29, 6
    %s1192 = sshra.s32 %s1191, 7
    %s1193 = sand.u32 %s1191, 127
    %s1194 = sadd.s32 %s1192, %s28
    %s1195 = smul.u32 %s1194, 128
    %s1196 = sshra.s32 %s1191, 7
    %s1197 = sand.u32 %s1191, 127
    %s1198 = sadd.s32 %s1195, %s1197
    %s1199 = sld [smem:[#allocation4 + %s1198]]
    %s1200 = smul.u32 %s1199, 32
    %s1201 = scalar_lea.vmem [#allocation5], %s1200
    %v1202 = vld [vmem:[%s1201] sm:$0xff]
    %v1203 = vld [vmem:[%s1201 + $0x8] sm:$0xff]
    %v1204 = vld [vmem:[%s1201 + $0x10] sm:$0xff]
    %v1205 = vld [vmem:[%s1201 + $0x18] sm:$0xff]
    %v1206 = vsel %vm56, %v1081, 0
    %1208 = vmatprep.subr.mxu0 0.0
    %1209 = vmatpush1.msra.mxu0 %v1202
    %1210 = vmatprep.subr.mxu0 0.0
    %1211 = vmatpush1.msra.mxu0 %v1203
    %1212 = vmatprep.subr.mxu0 0.0
    %1213 = vmatpush1.msra.mxu0 %v1204
    %1214 = vmatprep.subr.mxu0 0.0
    %1215 = vmatpush1.msra.mxu0 %v1205
    %1216 = vmatprep.subr.mxu0 0.0
    %1217 = vmatpush1.msra.mxu0 0.0
    %1218 = vmatprep.subr.mxu0 0.0
    %1219 = vmatpush1.msra.mxu0 0.0
    %1220 = vmatprep.subr.mxu0 0.0
    %1221 = vmatpush1.msra.mxu0 0.0
    %1222 = vmatprep.subr.mxu0 0.0
    %1223 = vmatpush1.msra.mxu0 0.0
    %1224 = vmatprep.subr.mxu0 0.0
    %1225 = vmatpush1.msra.mxu0 0.0
    %1226 = vmatprep.subr.mxu0 0.0
    %1227 = vmatpush1.msra.mxu0 0.0
    %1228 = vmatprep.subr.mxu0 0.0
    %1229 = vmatpush1.msra.mxu0 0.0
    %1230 = vmatprep.subr.mxu0 0.0
    %1231 = vmatpush1.msra.mxu0 0.0
    %1232 = vmatprep.subr.mxu0 0.0
    %1233 = vmatpush1.msra.mxu0 0.0
    %1234 = vmatprep.subr.mxu0 0.0
    %1235 = vmatpush1.msra.mxu0 0.0
    %1236 = vmatprep.subr.mxu0 0.0
    %1237 = vmatpush1.msra.mxu0 0.0
    %1238 = vmatprep.subr.mxu0 0.0
    %1239 = vmatpush1.msra.mxu0 0.0
    %1240 = vmatprep.subr.mxu0 0.0
    %1241 = vmatpush1.msra.mxu0 0.0
    %1242 = vmatprep.subr.mxu0 0.0
    %1243 = vmatpush1.msra.mxu0 0.0
    %1244 = vmatprep.subr.mxu0 0.0
    %1245 = vmatpush1.msra.mxu0 0.0
    %1246 = vmatprep.subr.mxu0 0.0
    %1247 = vmatpush1.msra.mxu0 0.0
    %1248 = vmatprep.subr.mxu0 0.0
    %1249 = vmatpush1.msra.mxu0 0.0
    %1250 = vmatprep.subr.mxu0 0.0
    %1251 = vmatpush1.msra.mxu0 0.0
    %1252 = vmatprep.subr.mxu0 0.0
    %1253 = vmatpush1.msra.mxu0 0.0
    %1254 = vmatprep.subr.mxu0 0.0
    %1255 = vmatpush1.msra.mxu0 0.0
    %1256 = vmatprep.subr.mxu0 0.0
    %1257 = vmatpush1.msra.mxu0 0.0
    %1258 = vmatprep.subr.mxu0 0.0
    %1259 = vmatpush1.msra.mxu0 0.0
    %1260 = vmatprep.subr.mxu0 0.0
    %1261 = vmatpush1.msra.mxu0 0.0
    %1262 = vmatprep.subr.mxu0 0.0
    %1263 = vmatpush1.msra.mxu0 0.0
    %1264 = vmatprep.subr.mxu0 0.0
    %1265 = vmatpush1.msra.mxu0 0.0
    %1266 = vmatprep.subr.mxu0 0.0
    %1267 = vmatpush1.msra.mxu0 0.0
    %1268 = vmatprep.subr.mxu0 0.0
    %1269 = vmatpush1.msra.mxu0 0.0
    %1270 = vmatprep.subr.mxu0 0.0
    %1271 = vmatpush1.msra.mxu0 0.0
    %1272 = vmatprep.mubr.f32.mxu0 0.0
    %1273 = vmatmul.mubr.f32.gmra.mrb[0].mxu0 %v1206
    %v1274 = vpop.f32.mrb[0].mxu0
    %v1275 = vadd.f32 0.0, %v1274
    %v1276 = vpop.f32.mrb[0].mxu0
    %1277 = vdwg.mxu0
    %v1278 = vmax.f32 %v1275, -10.0
    %v1279 = vmin.f32 %v1278, 10.0
    %v1282 = vunpack.c.l.s4 1983009808
    %v1283 = vunpack.c.0.s8 %v1282
    %v1284 = vlaneseq
    %v1285 = vshrl.u32 %v1284, 7
    %v1286 = vsub.s32 %v1283, %v1285
    %v1287 = vrot.slane %v1279, %v1286
    %1288 = vrot.lane.b32.xlu0 %v1287, 64
    %v1289 = vpop.permute.xlu0 %1288
    %1291 = vst.msk [vmem:[#allocation8 + $0x2] sm:$0x1] %vm521, %v1289
    %s1292 = sadd.s32 %s1192, %s134
    %s1293 = smul.u32 %s1292, 128
    %s1294 = sadd.s32 %s1293, %s1197
    %s1295 = sld [smem:[#allocation4 + %s1294]]
    %s1296 = smul.u32 %s1295, 32
    %s1297 = scalar_lea.vmem [#allocation5], %s1296
    %v1298 = vld [vmem:[%s1297] sm:$0xff]
    %v1299 = vld [vmem:[%s1297 + $0x8] sm:$0xff]
    %v1300 = vld [vmem:[%s1297 + $0x10] sm:$0xff]
    %v1301 = vld [vmem:[%s1297 + $0x18] sm:$0xff]
    %v1302 = vsel %vm56, %v1178, 0
    %1304 = vmatprep.subr.mxu0 0.0
    %1305 = vmatpush1.msra.mxu0 %v1298
    %1306 = vmatprep.subr.mxu0 0.0
    %1307 = vmatpush1.msra.mxu0 %v1299
    %1308 = vmatprep.subr.mxu0 0.0
    %1309 = vmatpush1.msra.mxu0 %v1300
    %1310 = vmatprep.subr.mxu0 0.0
    %1311 = vmatpush1.msra.mxu0 %v1301
    %1312 = vmatprep.subr.mxu0 0.0
    %1313 = vmatpush1.msra.mxu0 0.0
    %1314 = vmatprep.subr.mxu0 0.0
    %1315 = vmatpush1.msra.mxu0 0.0
    %1316 = vmatprep.subr.mxu0 0.0
    %1317 = vmatpush1.msra.mxu0 0.0
    %1318 = vmatprep.subr.mxu0 0.0
    %1319 = vmatpush1.msra.mxu0 0.0
    %1320 = vmatprep.subr.mxu0 0.0
    %1321 = vmatpush1.msra.mxu0 0.0
    %1322 = vmatprep.subr.mxu0 0.0
    %1323 = vmatpush1.msra.mxu0 0.0
    %1324 = vmatprep.subr.mxu0 0.0
    %1325 = vmatpush1.msra.mxu0 0.0
    %1326 = vmatprep.subr.mxu0 0.0
    %1327 = vmatpush1.msra.mxu0 0.0
    %1328 = vmatprep.subr.mxu0 0.0
    %1329 = vmatpush1.msra.mxu0 0.0
    %1330 = vmatprep.subr.mxu0 0.0
    %1331 = vmatpush1.msra.mxu0 0.0
    %1332 = vmatprep.subr.mxu0 0.0
    %1333 = vmatpush1.msra.mxu0 0.0
    %1334 = vmatprep.subr.mxu0 0.0
    %1335 = vmatpush1.msra.mxu0 0.0
    %1336 = vmatprep.subr.mxu0 0.0
    %1337 = vmatpush1.msra.mxu0 0.0
    %1338 = vmatprep.subr.mxu0 0.0
    %1339 = vmatpush1.msra.mxu0 0.0
    %1340 = vmatprep.subr.mxu0 0.0
    %1341 = vmatpush1.msra.mxu0 0.0
    %1342 = vmatprep.subr.mxu0 0.0
    %1343 = vmatpush1.msra.mxu0 0.0
    %1344 = vmatprep.subr.mxu0 0.0
    %1345 = vmatpush1.msra.mxu0 0.0
    %1346 = vmatprep.subr.mxu0 0.0
    %1347 = vmatpush1.msra.mxu0 0.0
    %1348 = vmatprep.subr.mxu0 0.0
    %1349 = vmatpush1.msra.mxu0 0.0
    %1350 = vmatprep.subr.mxu0 0.0
    %1351 = vmatpush1.msra.mxu0 0.0
    %1352 = vmatprep.subr.mxu0 0.0
    %1353 = vmatpush1.msra.mxu0 0.0
    %1354 = vmatprep.subr.mxu0 0.0
    %1355 = vmatpush1.msra.mxu0 0.0
    %1356 = vmatprep.subr.mxu0 0.0
    %1357 = vmatpush1.msra.mxu0 0.0
    %1358 = vmatprep.subr.mxu0 0.0
    %1359 = vmatpush1.msra.mxu0 0.0
    %1360 = vmatprep.subr.mxu0 0.0
    %1361 = vmatpush1.msra.mxu0 0.0
    %1362 = vmatprep.subr.mxu0 0.0
    %1363 = vmatpush1.msra.mxu0 0.0
    %1364 = vmatprep.subr.mxu0 0.0
    %1365 = vmatpush1.msra.mxu0 0.0
    %1366 = vmatprep.subr.mxu0 0.0
    %1367 = vmatpush1.msra.mxu0 0.0
    %1368 = vmatprep.mubr.f32.mxu0 0.0
    %1369 = vmatmul.mubr.f32.gmra.mrb[0].mxu0 %v1302
    %v1370 = vpop.f32.mrb[0].mxu0
    %v1371 = vadd.f32 0.0, %v1370
    %v1372 = vpop.f32.mrb[0].mxu0
    %1373 = vdwg.mxu0
    %v1374 = vmax.f32 %v1371, -10.0
    %v1375 = vmin.f32 %v1374, 10.0
    %v1378 = vunpack.c.l.s4 1983009808
    %v1379 = vunpack.c.0.s8 %v1378
    %v1380 = vlaneseq
    %v1381 = vshrl.u32 %v1380, 7
    %v1382 = vsub.s32 %v1379, %v1381
    %v1383 = vrot.slane %v1375, %v1382
    %1384 = vrot.lane.b32.xlu0 %v1383, 64
    %v1385 = vpop.permute.xlu0 %1384
    %1387 = vst.msk [vmem:[#allocation8 + $0x3] sm:$0x1] %vm521, %v1385
    %s1388 = sadd.s32 %s29, 7
    %s1389 = sshra.s32 %s1388, 7
    %s1390 = sand.u32 %s1388, 127
    %s1391 = sadd.s32 %s1389, %s28
    %s1392 = smul.u32 %s1391, 128
    %s1393 = sshra.s32 %s1388, 7
    %s1394 = sand.u32 %s1388, 127
    %s1395 = sadd.s32 %s1392, %s1394
    %s1396 = sld [smem:[#allocation4 + %s1395]]
    %s1397 = smul.u32 %s1396, 32
    %s1398 = scalar_lea.vmem [#allocation5], %s1397
    %v1399 = vld [vmem:[%s1398] sm:$0xff]
    %v1400 = vld [vmem:[%s1398 + $0x8] sm:$0xff]
    %v1401 = vld [vmem:[%s1398 + $0x10] sm:$0xff]
    %v1402 = vld [vmem:[%s1398 + $0x18] sm:$0xff]
    %v1403 = vsel %vm56, %v1279, 0
    %1405 = vmatprep.subr.mxu0 0.0
    %1406 = vmatpush1.msra.mxu0 %v1399
    %1407 = vmatprep.subr.mxu0 0.0
    %1408 = vmatpush1.msra.mxu0 %v1400
    %1409 = vmatprep.subr.mxu0 0.0
    %1410 = vmatpush1.msra.mxu0 %v1401
    %1411 = vmatprep.subr.mxu0 0.0
    %1412 = vmatpush1.msra.mxu0 %v1402
    %1413 = vmatprep.subr.mxu0 0.0
    %1414 = vmatpush1.msra.mxu0 0.0
    %1415 = vmatprep.subr.mxu0 0.0
    %1416 = vmatpush1.msra.mxu0 0.0
    %1417 = vmatprep.subr.mxu0 0.0
    %1418 = vmatpush1.msra.mxu0 0.0
    %1419 = vmatprep.subr.mxu0 0.0
    %1420 = vmatpush1.msra.mxu0 0.0
    %1421 = vmatprep.subr.mxu0 0.0
    %1422 = vmatpush1.msra.mxu0 0.0
    %1423 = vmatprep.subr.mxu0 0.0
    %1424 = vmatpush1.msra.mxu0 0.0
    %1425 = vmatprep.subr.mxu0 0.0
    %1426 = vmatpush1.msra.mxu0 0.0
    %1427 = vmatprep.subr.mxu0 0.0
    %1428 = vmatpush1.msra.mxu0 0.0
    %1429 = vmatprep.subr.mxu0 0.0
    %1430 = vmatpush1.msra.mxu0 0.0
    %1431 = vmatprep.subr.mxu0 0.0
    %1432 = vmatpush1.msra.mxu0 0.0
    %1433 = vmatprep.subr.mxu0 0.0
    %1434 = vmatpush1.msra.mxu0 0.0
    %1435 = vmatprep.subr.mxu0 0.0
    %1436 = vmatpush1.msra.mxu0 0.0
    %1437 = vmatprep.subr.mxu0 0.0
    %1438 = vmatpush1.msra.mxu0 0.0
    %1439 = vmatprep.subr.mxu0 0.0
    %1440 = vmatpush1.msra.mxu0 0.0
    %1441 = vmatprep.subr.mxu0 0.0
    %1442 = vmatpush1.msra.mxu0 0.0
    %1443 = vmatprep.subr.mxu0 0.0
    %1444 = vmatpush1.msra.mxu0 0.0
    %1445 = vmatprep.subr.mxu0 0.0
    %1446 = vmatpush1.msra.mxu0 0.0
    %1447 = vmatprep.subr.mxu0 0.0
    %1448 = vmatpush1.msra.mxu0 0.0
    %1449 = vmatprep.subr.mxu0 0.0
    %1450 = vmatpush1.msra.mxu0 0.0
    %1451 = vmatprep.subr.mxu0 0.0
    %1452 = vmatpush1.msra.mxu0 0.0
    %1453 = vmatprep.subr.mxu0 0.0
    %1454 = vmatpush1.msra.mxu0 0.0
    %1455 = vmatprep.subr.mxu0 0.0
    %1456 = vmatpush1.msra.mxu0 0.0
    %1457 = vmatprep.subr.mxu0 0.0
    %1458 = vmatpush1.msra.mxu0 0.0
    %1459 = vmatprep.subr.mxu0 0.0
    %1460 = vmatpush1.msra.mxu0 0.0
    %1461 = vmatprep.subr.mxu0 0.0
    %1462 = vmatpush1.msra.mxu0 0.0
    %1463 = vmatprep.subr.mxu0 0.0
    %1464 = vmatpush1.msra.mxu0 0.0
    %1465 = vmatprep.subr.mxu0 0.0
    %1466 = vmatpush1.msra.mxu0 0.0
    %1467 = vmatprep.subr.mxu0 0.0
    %1468 = vmatpush1.msra.mxu0 0.0
    %1469 = vmatprep.mubr.f32.mxu0 0.0
    %1470 = vmatmul.mubr.f32.gmra.mrb[0].mxu0 %v1403
    %v1471 = vpop.f32.mrb[0].mxu0
    %v1472 = vadd.f32 0.0, %v1471
    %v1473 = vpop.f32.mrb[0].mxu0
    %1474 = vdwg.mxu0
    %v1475 = vmax.f32 %v1472, -10.0
    %v1476 = vmin.f32 %v1475, 10.0
    %v1479 = vunpack.c.l.s4 1983009808
    %v1480 = vunpack.c.0.s8 %v1479
    %v1481 = vlaneseq
    %v1482 = vshrl.u32 %v1481, 7
    %v1483 = vsub.s32 %v1480, %v1482
    %v1484 = vrot.slane %v1476, %v1483
    %1485 = vrot.lane.b32.xlu0 %v1484, 96
    %v1486 = vpop.permute.xlu0 %1485
    %1488 = vst.msk [vmem:[#allocation8 + $0x2] sm:$0x1] %vm719, %v1486
    %s1489 = sadd.s32 %s1389, %s134
    %s1490 = smul.u32 %s1489, 128
    %s1491 = sadd.s32 %s1490, %s1394
    %s1492 = sld [smem:[#allocation4 + %s1491]]
    %s1493 = smul.u32 %s1492, 32
    %s1494 = scalar_lea.vmem [#allocation5], %s1493
    %v1495 = vld [vmem:[%s1494] sm:$0xff]
    %v1496 = vld [vmem:[%s1494 + $0x8] sm:$0xff]
    %v1497 = vld [vmem:[%s1494 + $0x10] sm:$0xff]
    %v1498 = vld [vmem:[%s1494 + $0x18] sm:$0xff]
    %v1499 = vsel %vm56, %v1375, 0
    %1501 = vmatprep.subr.mxu0 0.0
    %1502 = vmatpush1.msra.mxu0 %v1495
    %1503 = vmatprep.subr.mxu0 0.0
    %1504 = vmatpush1.msra.mxu0 %v1496
    %1505 = vmatprep.subr.mxu0 0.0
    %1506 = vmatpush1.msra.mxu0 %v1497
    %1507 = vmatprep.subr.mxu0 0.0
    %1508 = vmatpush1.msra.mxu0 %v1498
    %1509 = vmatprep.subr.mxu0 0.0
    %1510 = vmatpush1.msra.mxu0 0.0
    %1511 = vmatprep.subr.mxu0 0.0
    %1512 = vmatpush1.msra.mxu0 0.0
    %1513 = vmatprep.subr.mxu0 0.0
    %1514 = vmatpush1.msra.mxu0 0.0
    %1515 = vmatprep.subr.mxu0 0.0
    %1516 = vmatpush1.msra.mxu0 0.0
    %1517 = vmatprep.subr.mxu0 0.0
    %1518 = vmatpush1.msra.mxu0 0.0
    %1519 = vmatprep.subr.mxu0 0.0
    %1520 = vmatpush1.msra.mxu0 0.0
    %1521 = vmatprep.subr.mxu0 0.0
    %1522 = vmatpush1.msra.mxu0 0.0
    %1523 = vmatprep.subr.mxu0 0.0
    %1524 = vmatpush1.msra.mxu0 0.0
    %1525 = vmatprep.subr.mxu0 0.0
    %1526 = vmatpush1.msra.mxu0 0.0
    %1527 = vmatprep.subr.mxu0 0.0
    %1528 = vmatpush1.msra.mxu0 0.0
    %1529 = vmatprep.subr.mxu0 0.0
    %1530 = vmatpush1.msra.mxu0 0.0
    %1531 = vmatprep.subr.mxu0 0.0
    %1532 = vmatpush1.msra.mxu0 0.0
    %1533 = vmatprep.subr.mxu0 0.0
    %1534 = vmatpush1.msra.mxu0 0.0
    %1535 = vmatprep.subr.mxu0 0.0
    %1536 = vmatpush1.msra.mxu0 0.0
    %1537 = vmatprep.subr.mxu0 0.0
    %1538 = vmatpush1.msra.mxu0 0.0
    %1539 = vmatprep.subr.mxu0 0.0
    %1540 = vmatpush1.msra.mxu0 0.0
    %1541 = vmatprep.subr.mxu0 0.0
    %1542 = vmatpush1.msra.mxu0 0.0
    %1543 = vmatprep.subr.mxu0 0.0
    %1544 = vmatpush1.msra.mxu0 0.0
    %1545 = vmatprep.subr.mxu0 0.0
    %1546 = vmatpush1.msra.mxu0 0.0
    %1547 = vmatprep.subr.mxu0 0.0
    %1548 = vmatpush1.msra.mxu0 0.0
    %1549 = vmatprep.subr.mxu0 0.0
    %1550 = vmatpush1.msra.mxu0 0.0
    %1551 = vmatprep.subr.mxu0 0.0
    %1552 = vmatpush1.msra.mxu0 0.0
    %1553 = vmatprep.subr.mxu0 0.0
    %1554 = vmatpush1.msra.mxu0 0.0
    %1555 = vmatprep.subr.mxu0 0.0
    %1556 = vmatpush1.msra.mxu0 0.0
    %1557 = vmatprep.subr.mxu0 0.0
    %1558 = vmatpush1.msra.mxu0 0.0
    %1559 = vmatprep.subr.mxu0 0.0
    %1560 = vmatpush1.msra.mxu0 0.0
    %1561 = vmatprep.subr.mxu0 0.0
    %1562 = vmatpush1.msra.mxu0 0.0
    %1563 = vmatprep.subr.mxu0 0.0
    %1564 = vmatpush1.msra.mxu0 0.0
    %1565 = vmatprep.mubr.f32.mxu0 0.0
    %1566 = vmatmul.mubr.f32.gmra.mrb[0].mxu0 %v1499
    %v1567 = vpop.f32.mrb[0].mxu0
    %v1568 = vadd.f32 0.0, %v1567
    %v1569 = vpop.f32.mrb[0].mxu0
    %1570 = vdwg.mxu0
    %v1571 = vmax.f32 %v1568, -10.0
    %v1572 = vmin.f32 %v1571, 10.0
    %v1575 = vunpack.c.l.s4 1983009808
    %v1576 = vunpack.c.0.s8 %v1575
    %v1577 = vlaneseq
    %v1578 = vshrl.u32 %v1577, 7
    %v1579 = vsub.s32 %v1576, %v1578
    %v1580 = vrot.slane %v1572, %v1579
    %1581 = vrot.lane.b32.xlu0 %v1580, 96
    %v1582 = vpop.permute.xlu0 %1581
    %1584 = vst.msk [vmem:[#allocation8 + $0x3] sm:$0x1] %vm719, %v1582
    %1585 = vst.msk [vmem:[#allocation2] sm:$0x1] %vm132, %v1476
    %1586 = vst.msk [vmem:[#allocation2 + $0x1] sm:$0x1] %vm132, %v1572
    // Predicated region
    $region14: #{tpu_custom_call.1} parent=1 // pred_check
      _
    $region15: #{tpu_custom_call.1} parent=1 // pred_check_branch
      %1588 = sbr.rel (0) target = $region17
    $region16: #{tpu_custom_call.1} parent=1 // pred_region
      %s1590 = ssub.s32 64, 64
      %1591 = vsyncadd [#allocation7], %s1590
      %s1593 = sshll.u32 [#allocation8], 4
      %s1594 = int_to_ptr.vmem [resolvable:$true] %s1593
      %1596 = dma.vmem_to_hbm [thread:$0]  %s1594, 64, %s2, [#allocation7]
    $region17: #{tpu_custom_call.1} parent=1 // pred_fallthru
      _
    // Predicated region
    $region18: #{tpu_custom_call.1} parent=1 // pred_check
      _
    $region19: #{tpu_custom_call.1} parent=1 // pred_check_branch
      %1598 = sbr.rel (0) target = $region21
    $region20: #{tpu_custom_call.1} parent=1 // pred_region
      %1599 = dma.done [#allocation7], 64
    $region21: #{tpu_custom_call.1} parent=1 // pred_fallthru
      _
    %1600 = vsyncpa [#allocation6], 1
    %1601 = vsyncpa [#allocation7], 1

</llo_original>
